<compile_context>
chip_gen: v6e
topology: v6e:2x2x1
jax: 0.10.0
libtpu: 0.0.40
codegen_flags: <defaults>
</compile_context>

<pallas_src>
import math
import jax
import jax.numpy as jnp
from jax.experimental import pallas as pl
from jax.experimental.pallas import tpu as pltpu


def _gelu_exact(x):
    # PyTorch nn.GELU() default: exact erf formulation (f32 on the VPU).
    return 0.5 * x * (1.0 + jax.lax.erf(x * (1.0 / math.sqrt(2.0))))


def _softplus(x):
    # PyTorch nn.Softplus(beta=1, threshold=20): x for x > 20, else log1p(exp(x)).
    safe = jnp.minimum(x, 20.0)
    return jnp.where(x > 20.0, x, jnp.log1p(jnp.exp(safe)))


def variance_mlp_kernel(x_ref, w1_ref, b1_ref, w23_ref, b23_ref, o_ref):
    Bb, N, F = x_ref.shape

    # Collapse (Bb, N) -> rows so the MXU sees M = Bb*N (layout-free: F is a
    # multiple of 128 and N a multiple of 8; asserted in the wrapper).
    x = x_ref[...].reshape(Bb * N, F)

    # token_mlp[0] + GELU : bf16 MXU matmul, f32 accumulate, f32 activation.
    h = jnp.dot(x.astype(jnp.bfloat16), w1_ref[...],
                preferred_element_type=jnp.float32) + b1_ref[...]
    h = _gelu_exact(h)                                       # (Bb*N, H) f32

    # Mean over tokens BEFORE the (fused) head Linear (exact by linearity).
    hm = jnp.mean(h.reshape(Bb, N, -1), axis=1)              # (Bb, H) f32

    # Fused token_mlp[2] + variance_head[0]:  hm @ (W2@W3) + (b2@W3 + b3).
    v = jnp.dot(hm.astype(jnp.bfloat16), w23_ref[...],
                preferred_element_type=jnp.float32) + b23_ref[...]   # (Bb, F)

    o_ref[...] = _softplus(v).astype(o_ref.dtype)


def _num_tensorcores():
    """2 TensorCores per chip on v4 / v5p / v7x; 1 on v5e / v6e."""
    try:
        kind = jax.devices()[0].device_kind.lower()
    except Exception:
        return 1
    if any(tag in kind for tag in ("v7", "7x", "v4", "v5p")):
        return 2
    return 1


def _pick_block_b(B, N, *, max_rows=2048, min_rows_per_step=256, num_cores=1):
    """Pick a batch block Bb that divides B and is sublane-dense (Bb % 8 == 0,
    or Bb == B).  Use >= 2 grid steps only when the chip has 2 TensorCores AND
    each step still has >= min_rows_per_step rows; otherwise one big step."""
    valid = [bb for bb in range(1, B + 1)
             if B % bb == 0 and (bb % 8 == 0 or bb == B)]
    fits = [bb for bb in valid if bb * N <= max_rows] or [valid[0]]
    if num_cores >= 2:
        multi = [bb for bb in fits
                 if (B // bb) >= num_cores and bb * N >= min_rows_per_step]
        if multi:
            return max(multi)
    return max(fits)


def fuse_head_params(w2, b2, w3, b3):
    """Fold token_mlp[2] and variance_head[0] (consecutive Linears separated
    only by the linear token-mean) into one Linear.  Computed in f32."""
    w2f, b2f = w2.astype(jnp.float32), b2.astype(jnp.float32)
    w3f, b3f = w3.astype(jnp.float32), b3.astype(jnp.float32)
    w23 = w2f @ w3f                      # (H, F)
    b23 = b2f @ w3f + b3f                # (1, F)
    return w23, b23


def prepare_params(w1, b1, w2, b2, w3, b3):
    """One-time parameter preparation: head fusion + bf16 weight conversion.
    Do this once at parameter-creation time, NOT per forward call."""
    w23, b23 = fuse_head_params(w2, b2, w3, b3)
    return (w1.astype(jnp.bfloat16), b1.astype(jnp.float32),
            w23.astype(jnp.bfloat16), b23.astype(jnp.float32))


def variance_mlp(x, w1, b1, w23, b23, *, block_b=None, single_buffer_weights=True):
    B, N, F = x.shape
    H = w1.shape[1]

    # Layout preconditions for the in-kernel layout-free reshapes and the
    # (8, 128) BlockSpec rule.
    assert F % 128 == 0, "feature_dim must be a multiple of 128"
    assert H % 128 == 0, "hidden_dim must be a multiple of 128"
    assert N % 8 == 0, "token dim must be a multiple of 8"
    assert w1.dtype == jnp.bfloat16 and w23.dtype == jnp.bfloat16, (
        "weights must be pre-converted to bf16 once via prepare_params()")
    assert w1.shape == (F, H) and w23.shape == (H, F)

    if block_b is None:
        block_b = _pick_block_b(B, N, num_cores=_num_tensorcores())
    assert B % block_b == 0, "block_b must divide B"
    assert block_b % 8 == 0 or block_b == B, "block_b must be sublane-dense or == B"

    grid = (B // block_b,)

    # Advisory cost for XLA's scheduler around this small custom call.
    flops = 2 * B * N * F * H + 2 * B * H * F
    transcendentals = B * N * H + B * F
    bytes_accessed = (x.size * x.dtype.itemsize
                      + w1.size * 2 + w23.size * 2
                      + b1.size * 4 + b23.size * 4
                      + B * F * x.dtype.itemsize)
    cost = pl.CostEstimate(flops=flops, transcendentals=transcendentals,
                           bytes_accessed=bytes_accessed)

    # Conservative VMEM estimate (double-buffered x/out, weights, h scratch),
    # clamped to stay under v7x's 64 MiB physical VMEM.
    vmem_need = (2 * block_b * N * F * 4          # x blocks (f32, double-buffered)
                 + 2 * block_b * F * 4            # out blocks
                 + 2 * (F * H + H * F) * 2        # bf16 weights (worst case x2)
                 + 2 * (H + F) * 4                # biases
                 + 2 * block_b * N * H * 4)       # f32 intermediates headroom
    vmem_limit = int(min(max(32 * 1024 * 1024, 2 * vmem_need), 64 * 1024 * 1024))

    def _build_and_call(use_single_buffer):
        def resident(shape):
            idx = lambda b, _s=shape: (0,) * len(_s)
            if use_single_buffer:
                # Constant-index operands don't need double-buffering.
                return pl.BlockSpec(shape, idx, pipeline_mode=pl.Buffered(1))
            return pl.BlockSpec(shape, idx)

        grid_spec = pltpu.PrefetchScalarGridSpec(
            num_scalar_prefetch=0,
            grid=grid,
            in_specs=[
                pl.BlockSpec((block_b, N, F), lambda b: (b, 0, 0)),  # x block
                resident((F, H)),                                    # W1
                resident((1, H)),                                    # b1
                resident((H, F)),                                    # W23 fused
                resident((1, F)),                                    # b23 fused
            ],
            out_specs=pl.BlockSpec((block_b, F), lambda b: (b, 0)),  # sublane-dense
        )
        return pl.pallas_call(
            variance_mlp_kernel,
            out_shape=jax.ShapeDtypeStruct((B, F), x.dtype),
            grid_spec=grid_spec,
            cost_estimate=cost,
            compiler_params=pltpu.CompilerParams(
                dimension_semantics=("parallel",),
                vmem_limit_bytes=vmem_limit),
        )(x, w1, b1, w23, b23)

    if single_buffer_weights:
        try:
            return _build_and_call(True)
        except Exception:
            # Fallback for jax versions that reject pipeline_mode=Buffered(1):
            # identical math, default double-buffered resident weights.
            pass
    return _build_and_call(False)


def _init_linear(key, fan_in, fan_out, dtype=jnp.float32):
    # Deterministic init mimicking torch.nn.Linear (uniform +/- 1/sqrt(fan_in)).
    kw, kb = jax.random.split(key)
    bound = 1.0 / math.sqrt(fan_in)
    w = jax.random.uniform(kw, (fan_in, fan_out), dtype, -bound, bound)
    b = jax.random.uniform(kb, (1, fan_out), dtype, -bound, bound)
    return w, b


if __name__ == "__main__":
    # Small shapes consistent with the module: (batch, tokens, feature_dim).
    B, N, F, H = 16, 8, 256, 128

    key = jax.random.PRNGKey(0)
    kx, k1, k2, k3 = jax.random.split(key, 4)

    x = jax.random.normal(kx, (B, N, F), jnp.float32)
    w1, b1 = _init_linear(k1, F, H)   # token_mlp[0]: Linear(F, H)
    w2, b2 = _init_linear(k2, H, F)   # token_mlp[2]: Linear(H, F)
    w3, b3 = _init_linear(k3, F, F)   # variance_head[0]: Linear(F, F)

    # One-time prep: fuse W2@W3 / b2@W3+b3 (f32) and cast weights to bf16.
    params = prepare_params(w1, b1, w2, b2, w3, b3)

    out = variance_mlp(x, *params)
    out = jax.block_until_ready(out)
    assert out.shape == (B, F)

    # --- Reference 1: same math as the kernel (bf16 matmuls, fused head).
    w1b, b1f, w23b, b23f = params
    h_ref = _gelu_exact(
        jnp.einsum("bnf,fh->bnh", x.astype(jnp.bfloat16), w1b,
                   preferred_element_type=jnp.float32) + b1f)
    hm_ref = h_ref.mean(axis=1)
    v_ref = jnp.einsum("bh,hf->bf", hm_ref.astype(jnp.bfloat16), w23b,
                       preferred_element_type=jnp.float32) + b23f
    ref_kernel_math = _softplus(v_ref)
    assert jnp.allclose(out, ref_kernel_math, atol=2e-3, rtol=2e-3)

    # --- Reference 2: original torch-order math in full f32 (semantics check;
    # loose tolerance accounts for bf16 matmul inputs / reordered reductions).
    h32 = _gelu_exact(x @ w1 + b1)
    y32 = h32 @ w2 + b2
    m32 = y32.mean(axis=1)
    ref_f32 = _softplus(m32 @ w3 + b3)
    assert jnp.allclose(out, ref_f32, atol=5e-2, rtol=5e-2)

    print("KERNEL_OK")
</pallas_src>

<mosaic_0001>
module attributes {stable_mosaic.version = 11 : i64} {
  func.func @variance_mlp_kernel(%arg0: i32, %arg1: memref<16x8x256xf32, #tpu.memory_space<vmem>>, %arg2: memref<256x128xbf16, #tpu.memory_space<vmem>>, %arg3: memref<1x128xf32, #tpu.memory_space<vmem>>, %arg4: memref<128x256xbf16, #tpu.memory_space<vmem>>, %arg5: memref<1x256xf32, #tpu.memory_space<vmem>>, %arg6: memref<16x256xf32, #tpu.memory_space<vmem>>) attributes {dimension_semantics = [#tpu.dimension_semantics<parallel>], iteration_bounds = array<i64: 1>, scalar_prefetch = 0 : i64, scratch_operands = 0 : i64, tpu.core_type = #tpu.core_type<tc>, window_params = [{transform_indices = @transform_0, window_bounds = array<i64: 16, 8, 256>}, {pipeline_mode = #tpu.pipeline_mode<synchronous>, transform_indices = @transform_1, window_bounds = array<i64: 256, 128>}, {pipeline_mode = #tpu.pipeline_mode<synchronous>, transform_indices = @transform_2, window_bounds = array<i64: 1, 128>}, {pipeline_mode = #tpu.pipeline_mode<synchronous>, transform_indices = @transform_3, window_bounds = array<i64: 128, 256>}, {pipeline_mode = #tpu.pipeline_mode<synchronous>, transform_indices = @transform_4, window_bounds = array<i64: 1, 256>}, {transform_indices = @transform_5, window_bounds = array<i64: 16, 256>}]} {
    %c0 = arith.constant 0 : index
    %c0_0 = arith.constant 0 : index
    %c0_1 = arith.constant 0 : index
    %0 = vector.load %arg1[%c0, %c0_0, %c0_1] : memref<16x8x256xf32, #tpu.memory_space<vmem>>, vector<16x8x256xf32>
    %1 = vector.shape_cast %0 : vector<16x8x256xf32> to vector<128x256xf32>
    %2 = arith.truncf %1 : vector<128x256xf32> to vector<128x256xbf16>
    %c0_2 = arith.constant 0 : index
    %c0_3 = arith.constant 0 : index
    %3 = vector.load %arg2[%c0_2, %c0_3] : memref<256x128xbf16, #tpu.memory_space<vmem>>, vector<256x128xbf16>
    %cst = arith.constant dense<0.000000e+00> : vector<128x128xf32>
    %4 = tpu.matmul %2, %3, %cst {dimension_numbers = #tpu.dot_dimension_numbers<[1], [0], [0], [1], [0, 0, 1, 1], [], []>} : vector<128x256xbf16>, vector<256x128xbf16>, vector<128x128xf32> -> vector<128x128xf32>
    %c0_4 = arith.constant 0 : index
    %c0_5 = arith.constant 0 : index
    %5 = vector.load %arg3[%c0_4, %c0_5] : memref<1x128xf32, #tpu.memory_space<vmem>>, vector<1x128xf32>
    %6 = vector.broadcast %5 : vector<1x128xf32> to vector<128x128xf32>
    %7 = arith.addf %4, %6 : vector<128x128xf32>
    %cst_6 = arith.constant 5.000000e-01 : f32
    %8 = vector.broadcast %cst_6 : f32 to vector<128x128xf32>
    %9 = arith.mulf %8, %7 : vector<128x128xf32>
    %cst_7 = arith.constant 0.707106769 : f32
    %10 = vector.broadcast %cst_7 : f32 to vector<128x128xf32>
    %11 = arith.mulf %7, %10 : vector<128x128xf32>
    %12 = math.erf %11 : vector<128x128xf32>
    %cst_8 = arith.constant 1.000000e+00 : f32
    %13 = vector.broadcast %cst_8 : f32 to vector<128x128xf32>
    %14 = arith.addf %13, %12 : vector<128x128xf32>
    %15 = arith.mulf %9, %14 : vector<128x128xf32>
    %16 = vector.shape_cast %15 : vector<128x128xf32> to vector<16x8x128xf32>
    %cst_9 = arith.constant dense<0.000000e+00> : vector<16x128xf32>
    %17 = vector.multi_reduction <add>, %16, %cst_9 [1] : vector<16x8x128xf32> to vector<16x128xf32>
    %cst_10 = arith.constant 8.000000e+00 : f32
    %18 = vector.broadcast %cst_10 : f32 to vector<16x128xf32>
    %19 = arith.divf %17, %18 : vector<16x128xf32>
    %20 = arith.truncf %19 : vector<16x128xf32> to vector<16x128xbf16>
    %c0_11 = arith.constant 0 : index
    %c0_12 = arith.constant 0 : index
    %21 = vector.load %arg4[%c0_11, %c0_12] : memref<128x256xbf16, #tpu.memory_space<vmem>>, vector<128x256xbf16>
    %cst_13 = arith.constant dense<0.000000e+00> : vector<16x256xf32>
    %22 = tpu.matmul %20, %21, %cst_13 {dimension_numbers = #tpu.dot_dimension_numbers<[1], [0], [0], [1], [0, 0, 1, 1], [], []>} : vector<16x128xbf16>, vector<128x256xbf16>, vector<16x256xf32> -> vector<16x256xf32>
    %c0_14 = arith.constant 0 : index
    %c0_15 = arith.constant 0 : index
    %23 = vector.load %arg5[%c0_14, %c0_15] : memref<1x256xf32, #tpu.memory_space<vmem>>, vector<1x256xf32>
    %24 = vector.broadcast %23 : vector<1x256xf32> to vector<16x256xf32>
    %25 = arith.addf %22, %24 : vector<16x256xf32>
    %cst_16 = arith.constant 2.000000e+01 : f32
    %26 = vector.broadcast %cst_16 : f32 to vector<16x256xf32>
    %27 = arith.minimumf %25, %26 : vector<16x256xf32>
    %cst_17 = arith.constant 2.000000e+01 : f32
    %28 = vector.broadcast %cst_17 : f32 to vector<16x256xf32>
    %29 = arith.cmpf ogt, %25, %28 : vector<16x256xf32>
    %30 = math.exp %27 : vector<16x256xf32>
    %31 = math.log1p %30 : vector<16x256xf32>
    %32 = arith.select %29, %25, %31 : vector<16x256xi1>, vector<16x256xf32>
    %c0_18 = arith.constant 0 : index
    %c0_19 = arith.constant 0 : index
    %33 = vector.load %arg6[%c0_18, %c0_19] : memref<16x256xf32, #tpu.memory_space<vmem>>, vector<16x256xf32>
    tpu.vector_store %arg6[%c0_18, %c0_19], %32 {strides = array<i32>} : memref<16x256xf32, #tpu.memory_space<vmem>>, vector<16x256xf32>,
    return
  }
  func.func @transform_0(%arg0: i32) -> (i32, i32, i32) {
    %c0_i32 = arith.constant 0 : i32
    %c0_i32_0 = arith.constant 0 : i32
    %c0_i32_1 = arith.constant 0 : i32
    return %arg0, %c0_i32, %c0_i32_0 : i32, i32, i32
  }
  func.func @transform_1(%arg0: i32) -> (i32, i32) {
    %c0_i32 = arith.constant 0 : i32
    %c0_i32_0 = arith.constant 0 : i32
    %c0_i32_1 = arith.constant 0 : i32
    return %c0_i32, %c0_i32_0 : i32, i32
  }
  func.func @transform_2(%arg0: i32) -> (i32, i32) {
    %c0_i32 = arith.constant 0 : i32
    %c0_i32_0 = arith.constant 0 : i32
    %c0_i32_1 = arith.constant 0 : i32
    return %c0_i32, %c0_i32_0 : i32, i32
  }
  func.func @transform_3(%arg0: i32) -> (i32, i32) {
    %c0_i32 = arith.constant 0 : i32
    %c0_i32_0 = arith.constant 0 : i32
    %c0_i32_1 = arith.constant 0 : i32
    return %c0_i32, %c0_i32_0 : i32, i32
  }
  func.func @transform_4(%arg0: i32) -> (i32, i32) {
    %c0_i32 = arith.constant 0 : i32
    %c0_i32_0 = arith.constant 0 : i32
    %c0_i32_1 = arith.constant 0 : i32
    return %c0_i32, %c0_i32_0 : i32, i32
  }
  func.func @transform_5(%arg0: i32) -> (i32, i32) {
    %c0_i32 = arith.constant 0 : i32
    %c0_i32_0 = arith.constant 0 : i32
    return %arg0, %c0_i32 : i32, i32
  }
}

module attributes {stable_mosaic.version = 11 : i64} {
  func.func @variance_mlp_kernel(%arg0: i32, %arg1: memref<16x8x256xf32, #tpu.memory_space<vmem>>, %arg2: memref<256x128xbf16, #tpu.memory_space<vmem>>, %arg3: memref<1x128xf32, #tpu.memory_space<vmem>>, %arg4: memref<128x256xbf16, #tpu.memory_space<vmem>>, %arg5: memref<1x256xf32, #tpu.memory_space<vmem>>, %arg6: memref<16x256xf32, #tpu.memory_space<vmem>>) attributes {dimension_semantics = [#tpu.dimension_semantics<parallel>], iteration_bounds = array<i64: 1>, scalar_prefetch = 0 : i64, scratch_operands = 0 : i64, tpu.core_type = #tpu.core_type<tc>, window_params = [{transform_indices = @transform_0, window_bounds = array<i64: 16, 8, 256>}, {pipeline_mode = #tpu.pipeline_mode<synchronous>, transform_indices = @transform_1, window_bounds = array<i64: 256, 128>}, {pipeline_mode = #tpu.pipeline_mode<synchronous>, transform_indices = @transform_2, window_bounds = array<i64: 1, 128>}, {pipeline_mode = #tpu.pipeline_mode<synchronous>, transform_indices = @transform_3, window_bounds = array<i64: 128, 256>}, {pipeline_mode = #tpu.pipeline_mode<synchronous>, transform_indices = @transform_4, window_bounds = array<i64: 1, 256>}, {transform_indices = @transform_5, window_bounds = array<i64: 16, 256>}]} {
    %c0 = arith.constant 0 : index
    %c0_0 = arith.constant 0 : index
    %c0_1 = arith.constant 0 : index
    %0 = vector.load %arg1[%c0, %c0_0, %c0_1] : memref<16x8x256xf32, #tpu.memory_space<vmem>>, vector<16x8x256xf32>
    %1 = vector.shape_cast %0 : vector<16x8x256xf32> to vector<128x256xf32>
    %2 = arith.truncf %1 : vector<128x256xf32> to vector<128x256xbf16>
    %c0_2 = arith.constant 0 : index
    %c0_3 = arith.constant 0 : index
    %3 = vector.load %arg2[%c0_2, %c0_3] : memref<256x128xbf16, #tpu.memory_space<vmem>>, vector<256x128xbf16>
    %cst = arith.constant dense<0.000000e+00> : vector<128x128xf32>
    %4 = tpu.matmul %2, %3, %cst {dimension_numbers = #tpu.dot_dimension_numbers<[1], [0], [0], [1], [0, 0, 1, 1], [], []>} : vector<128x256xbf16>, vector<256x128xbf16>, vector<128x128xf32> -> vector<128x128xf32>
    %c0_4 = arith.constant 0 : index
    %c0_5 = arith.constant 0 : index
    %5 = vector.load %arg3[%c0_4, %c0_5] : memref<1x128xf32, #tpu.memory_space<vmem>>, vector<1x128xf32>
    %6 = vector.broadcast %5 : vector<1x128xf32> to vector<128x128xf32>
    %7 = arith.addf %4, %6 : vector<128x128xf32>
    %cst_6 = arith.constant 5.000000e-01 : f32
    %8 = vector.broadcast %cst_6 : f32 to vector<128x128xf32>
    %9 = arith.mulf %8, %7 : vector<128x128xf32>
    %cst_7 = arith.constant 0.707106769 : f32
    %10 = vector.broadcast %cst_7 : f32 to vector<128x128xf32>
    %11 = arith.mulf %7, %10 : vector<128x128xf32>
    %12 = math.erf %11 : vector<128x128xf32>
    %cst_8 = arith.constant 1.000000e+00 : f32
    %13 = vector.broadcast %cst_8 : f32 to vector<128x128xf32>
    %14 = arith.addf %13, %12 : vector<128x128xf32>
    %15 = arith.mulf %9, %14 : vector<128x128xf32>
    %16 = vector.shape_cast %15 : vector<128x128xf32> to vector<16x8x128xf32>
    %cst_9 = arith.constant dense<0.000000e+00> : vector<16x128xf32>
    %17 = vector.multi_reduction <add>, %16, %cst_9 [1] : vector<16x8x128xf32> to vector<16x128xf32>
    %cst_10 = arith.constant 8.000000e+00 : f32
    %18 = vector.broadcast %cst_10 : f32 to vector<16x128xf32>
    %19 = arith.divf %17, %18 : vector<16x128xf32>
    %20 = arith.truncf %19 : vector<16x128xf32> to vector<16x128xbf16>
    %c0_11 = arith.constant 0 : index
    %c0_12 = arith.constant 0 : index
    %21 = vector.load %arg4[%c0_11, %c0_12] : memref<128x256xbf16, #tpu.memory_space<vmem>>, vector<128x256xbf16>
    %cst_13 = arith.constant dense<0.000000e+00> : vector<16x256xf32>
    %22 = tpu.matmul %20, %21, %cst_13 {dimension_numbers = #tpu.dot_dimension_numbers<[1], [0], [0], [1], [0, 0, 1, 1], [], []>} : vector<16x128xbf16>, vector<128x256xbf16>, vector<16x256xf32> -> vector<16x256xf32>
    %c0_14 = arith.constant 0 : index
    %c0_15 = arith.constant 0 : index
    %23 = vector.load %arg5[%c0_14, %c0_15] : memref<1x256xf32, #tpu.memory_space<vmem>>, vector<1x256xf32>
    %24 = vector.broadcast %23 : vector<1x256xf32> to vector<16x256xf32>
    %25 = arith.addf %22, %24 : vector<16x256xf32>
    %cst_16 = arith.constant 2.000000e+01 : f32
    %26 = vector.broadcast %cst_16 : f32 to vector<16x256xf32>
    %27 = arith.minimumf %25, %26 : vector<16x256xf32>
    %cst_17 = arith.constant 2.000000e+01 : f32
    %28 = vector.broadcast %cst_17 : f32 to vector<16x256xf32>
    %29 = arith.cmpf ogt, %25, %28 : vector<16x256xf32>
    %30 = math.exp %27 : vector<16x256xf32>
    %31 = math.log1p %30 : vector<16x256xf32>
    %32 = arith.select %29, %25, %31 : vector<16x256xi1>, vector<16x256xf32>
    %c0_18 = arith.constant 0 : index
    %c0_19 = arith.constant 0 : index
    %33 = vector.load %arg6[%c0_18, %c0_19] : memref<16x256xf32, #tpu.memory_space<vmem>>, vector<16x256xf32>
    tpu.vector_store %arg6[%c0_18, %c0_19], %32 {strides = array<i32>} : memref<16x256xf32, #tpu.memory_space<vmem>>, vector<16x256xf32>,
    return
  }
  func.func @transform_0(%arg0: i32) -> (i32, i32, i32) {
    %c0_i32 = arith.constant 0 : i32
    %c0_i32_0 = arith.constant 0 : i32
    %c0_i32_1 = arith.constant 0 : i32
    return %arg0, %c0_i32, %c0_i32_0 : i32, i32, i32
  }
  func.func @transform_1(%arg0: i32) -> (i32, i32) {
    %c0_i32 = arith.constant 0 : i32
    %c0_i32_0 = arith.constant 0 : i32
    %c0_i32_1 = arith.constant 0 : i32
    return %c0_i32, %c0_i32_0 : i32, i32
  }
  func.func @transform_2(%arg0: i32) -> (i32, i32) {
    %c0_i32 = arith.constant 0 : i32
    %c0_i32_0 = arith.constant 0 : i32
    %c0_i32_1 = arith.constant 0 : i32
    return %c0_i32, %c0_i32_0 : i32, i32
  }
  func.func @transform_3(%arg0: i32) -> (i32, i32) {
    %c0_i32 = arith.constant 0 : i32
    %c0_i32_0 = arith.constant 0 : i32
    %c0_i32_1 = arith.constant 0 : i32
    return %c0_i32, %c0_i32_0 : i32, i32
  }
  func.func @transform_4(%arg0: i32) -> (i32, i32) {
    %c0_i32 = arith.constant 0 : i32
    %c0_i32_0 = arith.constant 0 : i32
    %c0_i32_1 = arith.constant 0 : i32
    return %c0_i32, %c0_i32_0 : i32, i32
  }
  func.func @transform_5(%arg0: i32) -> (i32, i32) {
    %c0_i32 = arith.constant 0 : i32
    %c0_i32_0 = arith.constant 0 : i32
    return %arg0, %c0_i32 : i32, i32
  }
}

</mosaic_0001>

<llo_original>
// kernel: tpu_custom_call.1
$region0: #{tpu_custom_call.1}
  #allocation0 [shape = 'u32[]', space=smem, size = 0x4, offset = 0x4, fixed_abs, tag = 'smem constant byte address 0x4 - core index']
  #allocation1 [shape = 'u32[144,128]{1,0:T(1,128)}', space=vmem, size = 0x12000, scoped, tag = 'internal scratch']
  %s0 = inlined_call_operand.hbm [shape: f32[16,8,256], index: 0, kind: input, shape index: {}]
  %s1 = inlined_call_operand.hbm [shape: bf16[256,128], index: 1, kind: input, shape index: {}]
  %s2 = inlined_call_operand.vmem [shape: f32[1,128], index: 2, kind: input, shape index: {}]
  %s3 = inlined_call_operand.hbm [shape: bf16[128,256], index: 3, kind: input, shape index: {}]
  %s4 = inlined_call_operand.vmem [shape: f32[1,256], index: 4, kind: input, shape index: {}]
  %s5 = inlined_call_operand.hbm [shape: f32[16,256], index: 5, kind: output, shape index: {}]
  %s6 = sld [smem:[#allocation0]]
  $region42: #{tpu_custom_call.1} parent=0
    _
  %s8 = ssub.s32 1, %s6
  %s9 = scalar_select 0, %s8, %s6
  $region1: #{tpu_custom_call.1} parent=0
    #allocation2 [shape = 'u8[131072]{0}', space=vmem, size = 0x20000, scoped, tag = 'input window, operand 0, single buffered']
    #allocation3 [shape = 's32[1]{0}', space=sflag, size = 0x4, scoped, tag = 'scoped memory for tpu_custom_call.1']
    #allocation4 [shape = 's32[1]{0}', space=sflag, size = 0x4, scoped, tag = 'scoped memory for tpu_custom_call.1']
    #allocation5 [shape = 'u8[65536]{0}', space=vmem, size = 0x10000, scoped, tag = 'input window, operand 1, single buffered']
    #allocation6 [shape = 's32[1]{0}', space=sflag, size = 0x4, scoped, tag = 'scoped memory for tpu_custom_call.1']
    #allocation7 [shape = 'u8[65536]{0}', space=vmem, size = 0x10000, scoped, tag = 'input window, operand 3, single buffered']
    #allocation8 [shape = 'u8[16384]{0}', space=vmem, size = 0x4000, scoped, tag = 'output window, operand 0, single buffered']
    %10 = vsyncpa [#allocation3], 0
    %11 = vsyncpa [#allocation6], 0
    %12 = vsyncpa [#allocation4], 0
    // Predicated region
    $region2: #{tpu_custom_call.1} parent=1 // pred_check
      _
    $region3: #{tpu_custom_call.1} parent=1 // pred_check_branch
      %14 = sbr.rel (0) target = $region5
    $region4: #{tpu_custom_call.1} parent=1 // pred_region
      %s16 = ssub.s32 4096, 4096
      %17 = vsyncadd [#allocation3], %s16
      %s18 = sshll.u32 [#allocation2], 4
      %s19 = int_to_ptr.vmem [resolvable:$true] %s18
      %24 = dma.hbm_to_vmem [thread:$0]  %s0, 4096, %s19, [#allocation3], 256, 256, 16
    $region5: #{tpu_custom_call.1} parent=1 // pred_fallthru
      _
    // Predicated region
    $region6: #{tpu_custom_call.1} parent=1 // pred_check
      _
    $region7: #{tpu_custom_call.1} parent=1 // pred_check_branch
      %26 = sbr.rel (0) target = $region9
    $region8: #{tpu_custom_call.1} parent=1 // pred_region
      %s28 = ssub.s32 2048, 2048
      %29 = vsyncadd [#allocation6], %s28
      %s30 = sshll.u32 [#allocation5], 4
      %s31 = int_to_ptr.vmem [resolvable:$true] %s30
      %36 = dma.hbm_to_vmem [thread:$0]  %s1, 2048, %s31, [#allocation6], 64, 64, 4
    $region9: #{tpu_custom_call.1} parent=1 // pred_fallthru
      _
    // Predicated region
    $region10: #{tpu_custom_call.1} parent=1 // pred_check
      _
    $region11: #{tpu_custom_call.1} parent=1 // pred_check_branch
      %38 = sbr.rel (0) target = $region13
    $region12: #{tpu_custom_call.1} parent=1 // pred_region
      _
    $region13: #{tpu_custom_call.1} parent=1 // pred_fallthru
      _
    // Predicated region
    $region14: #{tpu_custom_call.1} parent=1 // pred_check
      _
    $region15: #{tpu_custom_call.1} parent=1 // pred_check_branch
      %40 = sbr.rel (0) target = $region17
    $region16: #{tpu_custom_call.1} parent=1 // pred_region
      %s42 = ssub.s32 2048, 2048
      %43 = vsyncadd [#allocation6], %s42
      %s44 = sshll.u32 [#allocation7], 4
      %s45 = int_to_ptr.vmem [resolvable:$true] %s44
      %50 = dma.hbm_to_vmem [thread:$0]  %s3, 2048, %s45, [#allocation6], 128, 128, 8
    $region17: #{tpu_custom_call.1} parent=1 // pred_fallthru
      _
    // Predicated region
    $region18: #{tpu_custom_call.1} parent=1 // pred_check
      _
    $region19: #{tpu_custom_call.1} parent=1 // pred_check_branch
      %52 = sbr.rel (0) target = $region21
    $region20: #{tpu_custom_call.1} parent=1 // pred_region
      _
    $region21: #{tpu_custom_call.1} parent=1 // pred_fallthru
      _
    // Predicated region
    $region22: #{tpu_custom_call.1} parent=1 // pred_check
      _
    $region23: #{tpu_custom_call.1} parent=1 // pred_check_branch
      %54 = sbr.rel (0) target = $region25
    $region24: #{tpu_custom_call.1} parent=1 // pred_region
      %55 = dma.done [#allocation3], 4096
    $region25: #{tpu_custom_call.1} parent=1 // pred_fallthru
      _
    // Predicated region
    $region26: #{tpu_custom_call.1} parent=1 // pred_check
      _
    $region27: #{tpu_custom_call.1} parent=1 // pred_check_branch
      %57 = sbr.rel (0) target = $region29
    $region28: #{tpu_custom_call.1} parent=1 // pred_region
      %58 = dma.done [#allocation6], 2048
    $region29: #{tpu_custom_call.1} parent=1 // pred_fallthru
      _
    // Predicated region
    $region30: #{tpu_custom_call.1} parent=1 // pred_check
      _
    $region31: #{tpu_custom_call.1} parent=1 // pred_check_branch
      %60 = sbr.rel (0) target = $region33
    $region32: #{tpu_custom_call.1} parent=1 // pred_region
      %61 = dma.done [#allocation6], 2048
    $region33: #{tpu_custom_call.1} parent=1 // pred_fallthru
      _
    %v63 = vld [vmem:[#allocation2] sm:$0xff]
    %v64 = vld [vmem:[#allocation2 + $0x8] sm:$0xff]
    %v65 = vld [vmem:[#allocation2 + $0x10] sm:$0xff]
    %v66 = vld [vmem:[#allocation2 + $0x18] sm:$0xff]
    %v67 = vld [vmem:[#allocation2 + $0x20] sm:$0xff]
    %v68 = vld [vmem:[#allocation2 + $0x28] sm:$0xff]
    %v69 = vld [vmem:[#allocation2 + $0x30] sm:$0xff]
    %v70 = vld [vmem:[#allocation2 + $0x38] sm:$0xff]
    %v71 = vld [vmem:[#allocation2 + $0x40] sm:$0xff]
    %v72 = vld [vmem:[#allocation2 + $0x48] sm:$0xff]
    %v73 = vld [vmem:[#allocation2 + $0x50] sm:$0xff]
    %v74 = vld [vmem:[#allocation2 + $0x58] sm:$0xff]
    %v75 = vld [vmem:[#allocation2 + $0x60] sm:$0xff]
    %v76 = vld [vmem:[#allocation2 + $0x68] sm:$0xff]
    %v77 = vld [vmem:[#allocation2 + $0x70] sm:$0xff]
    %v78 = vld [vmem:[#allocation2 + $0x78] sm:$0xff]
    %v79 = vld [vmem:[#allocation2 + $0x80] sm:$0xff]
    %v80 = vld [vmem:[#allocation2 + $0x88] sm:$0xff]
    %v81 = vld [vmem:[#allocation2 + $0x90] sm:$0xff]
    %v82 = vld [vmem:[#allocation2 + $0x98] sm:$0xff]
    %v83 = vld [vmem:[#allocation2 + $0xa0] sm:$0xff]
    %v84 = vld [vmem:[#allocation2 + $0xa8] sm:$0xff]
    %v85 = vld [vmem:[#allocation2 + $0xb0] sm:$0xff]
    %v86 = vld [vmem:[#allocation2 + $0xb8] sm:$0xff]
    %v87 = vld [vmem:[#allocation2 + $0xc0] sm:$0xff]
    %v88 = vld [vmem:[#allocation2 + $0xc8] sm:$0xff]
    %v89 = vld [vmem:[#allocation2 + $0xd0] sm:$0xff]
    %v90 = vld [vmem:[#allocation2 + $0xd8] sm:$0xff]
    %v91 = vld [vmem:[#allocation2 + $0xe0] sm:$0xff]
    %v92 = vld [vmem:[#allocation2 + $0xe8] sm:$0xff]
    %v93 = vld [vmem:[#allocation2 + $0xf0] sm:$0xff]
    %v94 = vld [vmem:[#allocation2 + $0xf8] sm:$0xff]
    %v95 = vpack.c.bf16 %v65, %v63
    %v96 = vpack.c.bf16 %v66, %v64
    %v97 = vpack.c.bf16 %v69, %v67
    %v98 = vpack.c.bf16 %v70, %v68
    %v99 = vpack.c.bf16 %v73, %v71
    %v100 = vpack.c.bf16 %v74, %v72
    %v101 = vpack.c.bf16 %v77, %v75
    %v102 = vpack.c.bf16 %v78, %v76
    %v103 = vpack.c.bf16 %v81, %v79
    %v104 = vpack.c.bf16 %v82, %v80
    %v105 = vpack.c.bf16 %v85, %v83
    %v106 = vpack.c.bf16 %v86, %v84
    %v107 = vpack.c.bf16 %v89, %v87
    %v108 = vpack.c.bf16 %v90, %v88
    %v109 = vpack.c.bf16 %v93, %v91
    %v110 = vpack.c.bf16 %v94, %v92
    %v111 = vld [vmem:[#allocation5] sm:$0xf]
    %v112 = vld [vmem:[#allocation5 + $0x4] sm:$0xf]
    %v113 = vld [vmem:[#allocation5 + $0x8] sm:$0xf]
    %v114 = vld [vmem:[#allocation5 + $0xc] sm:$0xf]
    %v115 = vld [vmem:[#allocation5 + $0x10] sm:$0xf]
    %v116 = vld [vmem:[#allocation5 + $0x14] sm:$0xf]
    %v117 = vld [vmem:[#allocation5 + $0x18] sm:$0xf]
    %v118 = vld [vmem:[#allocation5 + $0x1c] sm:$0xf]
    %v119 = vld [vmem:[#allocation5 + $0x20] sm:$0xf]
    %v120 = vld [vmem:[#allocation5 + $0x24] sm:$0xf]
    %v121 = vld [vmem:[#allocation5 + $0x28] sm:$0xf]
    %v122 = vld [vmem:[#allocation5 + $0x2c] sm:$0xf]
    %v123 = vld [vmem:[#allocation5 + $0x30] sm:$0xf]
    %v124 = vld [vmem:[#allocation5 + $0x34] sm:$0xf]
    %v125 = vld [vmem:[#allocation5 + $0x38] sm:$0xf]
    %v126 = vld [vmem:[#allocation5 + $0x3c] sm:$0xf]
    %v127 = vld [vmem:[#allocation5 + $0x40] sm:$0xf]
    %v128 = vld [vmem:[#allocation5 + $0x44] sm:$0xf]
    %v129 = vld [vmem:[#allocation5 + $0x48] sm:$0xf]
    %v130 = vld [vmem:[#allocation5 + $0x4c] sm:$0xf]
    %v131 = vld [vmem:[#allocation5 + $0x50] sm:$0xf]
    %v132 = vld [vmem:[#allocation5 + $0x54] sm:$0xf]
    %v133 = vld [vmem:[#allocation5 + $0x58] sm:$0xf]
    %v134 = vld [vmem:[#allocation5 + $0x5c] sm:$0xf]
    %v135 = vld [vmem:[#allocation5 + $0x60] sm:$0xf]
    %v136 = vld [vmem:[#allocation5 + $0x64] sm:$0xf]
    %v137 = vld [vmem:[#allocation5 + $0x68] sm:$0xf]
    %v138 = vld [vmem:[#allocation5 + $0x6c] sm:$0xf]
    %v139 = vld [vmem:[#allocation5 + $0x70] sm:$0xf]
    %v140 = vld [vmem:[#allocation5 + $0x74] sm:$0xf]
    %v141 = vld [vmem:[#allocation5 + $0x78] sm:$0xf]
    %v142 = vld [vmem:[#allocation5 + $0x7c] sm:$0xf]
    %v143 = vld [vmem:[%s2] sm:$0x1]
    %v145 = vlaneseq
    %v146 = vshrl.u32 %v145, 7
    %v147 = vsub.s32 0, %v146
    %v148 = vrot.slane %v143, %v147
    %v182 = vunpack.c.l.b16 %v111
    %v183 = vunpack.c.l.b16 %v112
    %v184 = vunpack.c.l.b16 %v113
    %v185 = vunpack.c.l.b16 %v114
    %v186 = vunpack.c.l.b16 %v115
    %v187 = vunpack.c.l.b16 %v116
    %v188 = vunpack.c.l.b16 %v117
    %v189 = vunpack.c.l.b16 %v118
    %v190 = vunpack.c.l.b16 %v119
    %v191 = vunpack.c.l.b16 %v120
    %v192 = vunpack.c.l.b16 %v121
    %v193 = vunpack.c.l.b16 %v122
    %v194 = vunpack.c.l.b16 %v123
    %v195 = vunpack.c.l.b16 %v124
    %v196 = vunpack.c.l.b16 %v125
    %v197 = vunpack.c.l.b16 %v126
    %v198 = vunpack.c.l.b16 %v127
    %v199 = vunpack.c.l.b16 %v128
    %v200 = vunpack.c.l.b16 %v129
    %v201 = vunpack.c.l.b16 %v130
    %v202 = vunpack.c.l.b16 %v131
    %v203 = vunpack.c.l.b16 %v132
    %v204 = vunpack.c.l.b16 %v133
    %v205 = vunpack.c.l.b16 %v134
    %v206 = vunpack.c.l.b16 %v135
    %v207 = vunpack.c.l.b16 %v136
    %v208 = vunpack.c.l.b16 %v137
    %v209 = vunpack.c.l.b16 %v138
    %v210 = vunpack.c.l.b16 %v139
    %v211 = vunpack.c.l.b16 %v140
    %v212 = vunpack.c.l.b16 %v141
    %v213 = vunpack.c.l.b16 %v142
    %v214 = vpack.c.b16 %v183, %v182
    %v215 = vpack.c.b16 %v185, %v184
    %v216 = vpack.c.b16 %v187, %v186
    %v217 = vpack.c.b16 %v189, %v188
    %v218 = vpack.c.b16 %v191, %v190
    %v219 = vpack.c.b16 %v193, %v192
    %v220 = vpack.c.b16 %v195, %v194
    %v221 = vpack.c.b16 %v197, %v196
    %v222 = vpack.c.b16 %v199, %v198
    %v223 = vpack.c.b16 %v201, %v200
    %v224 = vpack.c.b16 %v203, %v202
    %v225 = vpack.c.b16 %v205, %v204
    %v226 = vpack.c.b16 %v207, %v206
    %v227 = vpack.c.b16 %v209, %v208
    %v228 = vpack.c.b16 %v211, %v210
    %v229 = vpack.c.b16 %v213, %v212
    %246 = vmatprep.subr.bf16.mxu0 0
    %247 = vmatpush1.bf16.msra.mxu0 %v221
    %248 = vmatprep.subr.bf16.mxu0 0
    %249 = vmatpush1.bf16.msra.mxu0 %v220
    %250 = vmatprep.subr.bf16.mxu0 0
    %251 = vmatpush1.bf16.msra.mxu0 %v219
    %252 = vmatprep.subr.bf16.mxu0 0
    %253 = vmatpush1.bf16.msra.mxu0 %v218
    %254 = vmatprep.subr.bf16.mxu0 0
    %255 = vmatpush1.bf16.msra.mxu0 %v217
    %256 = vmatprep.subr.bf16.mxu0 0
    %257 = vmatpush1.bf16.msra.mxu0 %v216
    %258 = vmatprep.subr.bf16.mxu0 0
    %259 = vmatpush1.bf16.msra.mxu0 %v215
    %260 = vmatprep.subr.bf16.mxu0 0
    %261 = vmatpush1.bf16.msra.mxu0 %v214
    %262 = vmatprep.subr.bf16.mxu0 0
    %263 = vmatpush2.bf16.msra.mxu0 %v229
    %264 = vmatprep.subr.bf16.mxu0 0
    %265 = vmatpush2.bf16.msra.mxu0 %v228
    %266 = vmatprep.subr.bf16.mxu0 0
    %267 = vmatpush2.bf16.msra.mxu0 %v227
    %268 = vmatprep.subr.bf16.mxu0 0
    %269 = vmatpush2.bf16.msra.mxu0 %v226
    %270 = vmatprep.subr.bf16.mxu0 0
    %271 = vmatpush2.bf16.msra.mxu0 %v225
    %272 = vmatprep.subr.bf16.mxu0 0
    %273 = vmatpush2.bf16.msra.mxu0 %v224
    %274 = vmatprep.subr.bf16.mxu0 0
    %275 = vmatpush2.bf16.msra.mxu0 %v223
    %276 = vmatprep.subr.bf16.mxu0 0
    %277 = vmatpush2.bf16.msra.mxu0 %v222
    %278 = vmatprep.mubr.bf16.mxu0 %v96
    %279 = vmatmul.mubr.bf16.gmra.mxu0 %v95
    %v280 = vpop.f32.mrf.mxu0
    %v281 = vadd.f32 %v148, %v280
    %v282 = vpop.f32.mrf.mxu0
    %v283 = vpop.f32.mrf.mxu0
    %v284 = vadd.f32 %v148, %v283
    %v285 = vpop.f32.mrf.mxu0
    %286 = vmatprep.mubr.bf16.mxu0 %v98
    %287 = vmatmul.mubr.bf16.gmra.mxu0 %v97
    %v288 = vpop.f32.mrf.mxu0
    %v289 = vadd.f32 %v148, %v288
    %v290 = vpop.f32.mrf.mxu0
    %v291 = vpop.f32.mrf.mxu0
    %v292 = vadd.f32 %v148, %v291
    %v293 = vpop.f32.mrf.mxu0
    %294 = vmatprep.mubr.bf16.mxu0 %v100
    %295 = vmatmul.mubr.bf16.gmra.mxu0 %v99
    %v296 = vpop.f32.mrf.mxu0
    %v297 = vadd.f32 %v148, %v296
    %v298 = vpop.f32.mrf.mxu0
    %v299 = vpop.f32.mrf.mxu0
    %v300 = vadd.f32 %v148, %v299
    %v301 = vpop.f32.mrf.mxu0
    %302 = vmatprep.mubr.bf16.mxu0 %v102
    %303 = vmatmul.mubr.bf16.gmra.mxu0 %v101
    %v304 = vpop.f32.mrf.mxu0
    %v305 = vadd.f32 %v148, %v304
    %v306 = vpop.f32.mrf.mxu0
    %v307 = vpop.f32.mrf.mxu0
    %v308 = vadd.f32 %v148, %v307
    %v309 = vpop.f32.mrf.mxu0
    %310 = vmatprep.mubr.bf16.mxu0 %v104
    %311 = vmatmul.mubr.bf16.gmra.mxu0 %v103
    %v312 = vpop.f32.mrf.mxu0
    %v313 = vadd.f32 %v148, %v312
    %v314 = vpop.f32.mrf.mxu0
    %v315 = vpop.f32.mrf.mxu0
    %v316 = vadd.f32 %v148, %v315
    %v317 = vpop.f32.mrf.mxu0
    %318 = vmatprep.mubr.bf16.mxu0 %v106
    %319 = vmatmul.mubr.bf16.gmra.mxu0 %v105
    %v320 = vpop.f32.mrf.mxu0
    %v321 = vadd.f32 %v148, %v320
    %v322 = vpop.f32.mrf.mxu0
    %v323 = vpop.f32.mrf.mxu0
    %v324 = vadd.f32 %v148, %v323
    %v325 = vpop.f32.mrf.mxu0
    %326 = vmatprep.mubr.bf16.mxu0 %v108
    %327 = vmatmul.mubr.bf16.gmra.mxu0 %v107
    %v328 = vpop.f32.mrf.mxu0
    %v329 = vadd.f32 %v148, %v328
    %v330 = vpop.f32.mrf.mxu0
    %v331 = vpop.f32.mrf.mxu0
    %v332 = vadd.f32 %v148, %v331
    %v333 = vpop.f32.mrf.mxu0
    %334 = vmatprep.mubr.bf16.mxu0 %v110
    %335 = vmatmul.mubr.bf16.gmra.mxu0 %v109
    %v336 = vpop.f32.mrf.mxu0
    %v337 = vadd.f32 %v148, %v336
    %v338 = vpop.f32.mrf.mxu0
    %v339 = vpop.f32.mrf.mxu0
    %v340 = vadd.f32 %v148, %v339
    %v341 = vpop.f32.mrf.mxu0
    %342 = vdwg.mxu0
    %v343 = vmul.f32 %v281, 0.5
    %v344 = vmul.f32 %v284, 0.5
    %v345 = vmul.f32 %v289, 0.5
    %v346 = vmul.f32 %v292, 0.5
    %v347 = vmul.f32 %v297, 0.5
    %v348 = vmul.f32 %v300, 0.5
    %v349 = vmul.f32 %v305, 0.5
    %v350 = vmul.f32 %v308, 0.5
    %v351 = vmul.f32 %v313, 0.5
    %v352 = vmul.f32 %v316, 0.5
    %v353 = vmul.f32 %v321, 0.5
    %v354 = vmul.f32 %v324, 0.5
    %v355 = vmul.f32 %v329, 0.5
    %v356 = vmul.f32 %v332, 0.5
    %v357 = vmul.f32 %v337, 0.5
    %v358 = vmul.f32 %v340, 0.5
    %v359 = vmul.f32 %v281, 0.70710677
    %v360 = vmul.f32 %v284, 0.70710677
    %v361 = vmul.f32 %v289, 0.70710677
    %v362 = vmul.f32 %v292, 0.70710677
    %v363 = vmul.f32 %v297, 0.70710677
    %v364 = vmul.f32 %v300, 0.70710677
    %v365 = vmul.f32 %v305, 0.70710677
    %v366 = vmul.f32 %v308, 0.70710677
    %v367 = vmul.f32 %v313, 0.70710677
    %v368 = vmul.f32 %v316, 0.70710677
    %v369 = vmul.f32 %v321, 0.70710677
    %v370 = vmul.f32 %v324, 0.70710677
    %v371 = vmul.f32 %v329, 0.70710677
    %v372 = vmul.f32 %v332, 0.70710677
    %v373 = vmul.f32 %v337, 0.70710677
    %v374 = vmul.f32 %v340, 0.70710677
    %v375 = verf.f32.pop %v359
    %v376 = verf.f32.pop %v360
    %v377 = verf.f32.pop %v361
    %v378 = verf.f32.pop %v362
    %v379 = verf.f32.pop %v363
    %v380 = verf.f32.pop %v364
    %v381 = verf.f32.pop %v365
    %v382 = verf.f32.pop %v366
    %v383 = verf.f32.pop %v367
    %v384 = verf.f32.pop %v368
    %v385 = verf.f32.pop %v369
    %v386 = verf.f32.pop %v370
    %v387 = verf.f32.pop %v371
    %v388 = verf.f32.pop %v372
    %v389 = verf.f32.pop %v373
    %v390 = verf.f32.pop %v374
    %v391 = vadd.f32 %v375, 1.0
    %v392 = vadd.f32 %v376, 1.0
    %v393 = vadd.f32 %v377, 1.0
    %v394 = vadd.f32 %v378, 1.0
    %v395 = vadd.f32 %v379, 1.0
    %v396 = vadd.f32 %v380, 1.0
    %v397 = vadd.f32 %v381, 1.0
    %v398 = vadd.f32 %v382, 1.0
    %v399 = vadd.f32 %v383, 1.0
    %v400 = vadd.f32 %v384, 1.0
    %v401 = vadd.f32 %v385, 1.0
    %v402 = vadd.f32 %v386, 1.0
    %v403 = vadd.f32 %v387, 1.0
    %v404 = vadd.f32 %v388, 1.0
    %v405 = vadd.f32 %v389, 1.0
    %v406 = vadd.f32 %v390, 1.0
    %v407 = vmul.f32 %v343, %v391
    %v408 = vmul.f32 %v344, %v392
    %v409 = vmul.f32 %v345, %v393
    %v410 = vmul.f32 %v346, %v394
    %v411 = vmul.f32 %v347, %v395
    %v412 = vmul.f32 %v348, %v396
    %v413 = vmul.f32 %v349, %v397
    %v414 = vmul.f32 %v350, %v398
    %v415 = vmul.f32 %v351, %v399
    %v416 = vmul.f32 %v352, %v400
    %v417 = vmul.f32 %v353, %v401
    %v418 = vmul.f32 %v354, %v402
    %v419 = vmul.f32 %v355, %v403
    %v420 = vmul.f32 %v356, %v404
    %v421 = vmul.f32 %v357, %v405
    %v422 = vmul.f32 %v358, %v406
    %v423 = vrot.slane %v407, 4
    %v424 = vadd.f32 %v407, %v423
    %v425 = vrot.slane %v424, 2
    %v426 = vadd.f32 %v424, %v425
    %v427 = vrot.slane %v426, 1
    %v428 = vadd.f32 %v426, %v427
    %v429 = vrot.slane %v408, 4
    %v430 = vadd.f32 %v408, %v429
    %v431 = vrot.slane %v430, 2
    %v432 = vadd.f32 %v430, %v431
    %v433 = vrot.slane %v432, 1
    %v434 = vadd.f32 %v432, %v433
    %v435 = vrot.slane %v409, 4
    %v436 = vadd.f32 %v409, %v435
    %v437 = vrot.slane %v436, 2
    %v438 = vadd.f32 %v436, %v437
    %v439 = vrot.slane %v438, 1
    %v440 = vadd.f32 %v438, %v439
    %v441 = vrot.slane %v410, 4
    %v442 = vadd.f32 %v410, %v441
    %v443 = vrot.slane %v442, 2
    %v444 = vadd.f32 %v442, %v443
    %v445 = vrot.slane %v444, 1
    %v446 = vadd.f32 %v444, %v445
    %v447 = vrot.slane %v411, 4
    %v448 = vadd.f32 %v411, %v447
    %v449 = vrot.slane %v448, 2
    %v450 = vadd.f32 %v448, %v449
    %v451 = vrot.slane %v450, 1
    %v452 = vadd.f32 %v450, %v451
    %v453 = vrot.slane %v412, 4
    %v454 = vadd.f32 %v412, %v453
    %v455 = vrot.slane %v454, 2
    %v456 = vadd.f32 %v454, %v455
    %v457 = vrot.slane %v456, 1
    %v458 = vadd.f32 %v456, %v457
    %v459 = vrot.slane %v413, 4
    %v460 = vadd.f32 %v413, %v459
    %v461 = vrot.slane %v460, 2
    %v462 = vadd.f32 %v460, %v461
    %v463 = vrot.slane %v462, 1
    %v464 = vadd.f32 %v462, %v463
    %v465 = vrot.slane %v414, 4
    %v466 = vadd.f32 %v414, %v465
    %v467 = vrot.slane %v466, 2
    %v468 = vadd.f32 %v466, %v467
    %v469 = vrot.slane %v468, 1
    %v470 = vadd.f32 %v468, %v469
    %v471 = vrot.slane %v415, 4
    %v472 = vadd.f32 %v415, %v471
    %v473 = vrot.slane %v472, 2
    %v474 = vadd.f32 %v472, %v473
    %v475 = vrot.slane %v474, 1
    %v476 = vadd.f32 %v474, %v475
    %v477 = vrot.slane %v416, 4
    %v478 = vadd.f32 %v416, %v477
    %v479 = vrot.slane %v478, 2
    %v480 = vadd.f32 %v478, %v479
    %v481 = vrot.slane %v480, 1
    %v482 = vadd.f32 %v480, %v481
    %v483 = vrot.slane %v417, 4
    %v484 = vadd.f32 %v417, %v483
    %v485 = vrot.slane %v484, 2
    %v486 = vadd.f32 %v484, %v485
    %v487 = vrot.slane %v486, 1
    %v488 = vadd.f32 %v486, %v487
    %v489 = vrot.slane %v418, 4
    %v490 = vadd.f32 %v418, %v489
    %v491 = vrot.slane %v490, 2
    %v492 = vadd.f32 %v490, %v491
    %v493 = vrot.slane %v492, 1
    %v494 = vadd.f32 %v492, %v493
    %v495 = vrot.slane %v419, 4
    %v496 = vadd.f32 %v419, %v495
    %v497 = vrot.slane %v496, 2
    %v498 = vadd.f32 %v496, %v497
    %v499 = vrot.slane %v498, 1
    %v500 = vadd.f32 %v498, %v499
    %v501 = vrot.slane %v420, 4
    %v502 = vadd.f32 %v420, %v501
    %v503 = vrot.slane %v502, 2
    %v504 = vadd.f32 %v502, %v503
    %v505 = vrot.slane %v504, 1
    %v506 = vadd.f32 %v504, %v505
    %v507 = vrot.slane %v421, 4
    %v508 = vadd.f32 %v421, %v507
    %v509 = vrot.slane %v508, 2
    %v510 = vadd.f32 %v508, %v509
    %v511 = vrot.slane %v510, 1
    %v512 = vadd.f32 %v510, %v511
    %v513 = vrot.slane %v422, 4
    %v514 = vadd.f32 %v422, %v513
    %v515 = vrot.slane %v514, 2
    %v516 = vadd.f32 %v514, %v515
    %v517 = vrot.slane %v516, 1
    %v518 = vadd.f32 %v516, %v517
    %v519 = vrcp.pop 8.0
    %v520 = vmul.f32 %v428, %v519
    %v521 = vmul.f32 %v434, %v519
    %v522 = vmul.f32 %v440, %v519
    %v523 = vmul.f32 %v446, %v519
    %v524 = vmul.f32 %v452, %v519
    %v525 = vmul.f32 %v458, %v519
    %v526 = vmul.f32 %v464, %v519
    %v527 = vmul.f32 %v470, %v519
    %v528 = vmul.f32 %v476, %v519
    %v529 = vmul.f32 %v482, %v519
    %v530 = vmul.f32 %v488, %v519
    %v531 = vmul.f32 %v494, %v519
    %v532 = vmul.f32 %v500, %v519
    %v533 = vmul.f32 %v506, %v519
    %v534 = vmul.f32 %v512, %v519
    %v535 = vmul.f32 %v518, %v519
    %v536 = vpack.c.bf16 %v520, %v520
    %v537 = vpack.c.bf16 %v521, %v521
    %v538 = vpack.c.bf16 %v522, %v522
    %v539 = vpack.c.bf16 %v523, %v523
    %v540 = vpack.c.bf16 %v524, %v524
    %v541 = vpack.c.bf16 %v525, %v525
    %v542 = vpack.c.bf16 %v526, %v526
    %v543 = vpack.c.bf16 %v527, %v527
    %v544 = vpack.c.bf16 %v528, %v528
    %v545 = vpack.c.bf16 %v529, %v529
    %v546 = vpack.c.bf16 %v530, %v530
    %v547 = vpack.c.bf16 %v531, %v531
    %v548 = vpack.c.bf16 %v532, %v532
    %v549 = vpack.c.bf16 %v533, %v533
    %v550 = vpack.c.bf16 %v534, %v534
    %v551 = vpack.c.bf16 %v535, %v535
    %v552 = vld [vmem:[#allocation7] sm:$0xff]
    %v553 = vld [vmem:[#allocation7 + $0x8] sm:$0xff]
    %v554 = vld [vmem:[#allocation7 + $0x10] sm:$0xff]
    %v555 = vld [vmem:[#allocation7 + $0x18] sm:$0xff]
    %v556 = vld [vmem:[#allocation7 + $0x20] sm:$0xff]
    %v557 = vld [vmem:[#allocation7 + $0x28] sm:$0xff]
    %v558 = vld [vmem:[#allocation7 + $0x30] sm:$0xff]
    %v559 = vld [vmem:[#allocation7 + $0x38] sm:$0xff]
    %v560 = vld [vmem:[#allocation7 + $0x40] sm:$0xff]
    %v561 = vld [vmem:[#allocation7 + $0x48] sm:$0xff]
    %v562 = vld [vmem:[#allocation7 + $0x50] sm:$0xff]
    %v563 = vld [vmem:[#allocation7 + $0x58] sm:$0xff]
    %v564 = vld [vmem:[#allocation7 + $0x60] sm:$0xff]
    %v565 = vld [vmem:[#allocation7 + $0x68] sm:$0xff]
    %v566 = vld [vmem:[#allocation7 + $0x70] sm:$0xff]
    %v567 = vld [vmem:[#allocation7 + $0x78] sm:$0xff]
    %v568 = vld [vmem:[%s4] sm:$0x3]
    %v570 = vlaneseq
    %v571 = vshrl.u32 %v570, 7
    %v572 = vsub.s32 0, %v571
    %v573 = vrot.slane %v568, %v572
    %v574 = vlaneseq
    %v575 = vshrl.u32 %v574, 7
    %v576 = vsub.s32 1, %v575
    %v577 = vrot.slane %v568, %v576
    %v596 = vunpack.c.l.b16 %v536
    %v597 = vunpack.c.l.b16 %v537
    %v598 = vunpack.c.l.b16 %v538
    %v599 = vunpack.c.l.b16 %v539
    %v600 = vunpack.c.l.b16 %v540
    %v601 = vunpack.c.l.b16 %v541
    %v602 = vunpack.c.l.b16 %v542
    %v603 = vunpack.c.l.b16 %v543
    %v604 = vunpack.c.l.b16 %v544
    %v605 = vunpack.c.l.b16 %v545
    %v606 = vunpack.c.l.b16 %v546
    %v607 = vunpack.c.l.b16 %v547
    %v608 = vunpack.c.l.b16 %v548
    %v609 = vunpack.c.l.b16 %v549
    %v610 = vunpack.c.l.b16 %v550
    %v611 = vunpack.c.l.b16 %v551
    %vm612 = vcmask 1041409
    %v613 = vsel %vm612, %v597, %v596
    %vm614 = vcmask 1042434
    %v615 = vsel %vm614, %v598, %v613
    %vm616 = vcmask 1043459
    %v617 = vsel %vm616, %v599, %v615
    %vm618 = vcmask 1044484
    %v619 = vsel %vm618, %v600, %v617
    %vm620 = vcmask 1045509
    %v621 = vsel %vm620, %v601, %v619
    %vm622 = vcmask 1046534
    %v623 = vsel %vm622, %v602, %v621
    %vm624 = vcmask 1047559
    %v625 = vsel %vm624, %v603, %v623
    %v626 = vsel %vm612, %v605, %v604
    %v627 = vsel %vm614, %v606, %v626
    %v628 = vsel %vm616, %v607, %v627
    %v629 = vsel %vm618, %v608, %v628
    %v630 = vsel %vm620, %v609, %v629
    %v631 = vsel %vm622, %v610, %v630
    %v632 = vsel %vm624, %v611, %v631
    %v633 = vpack.c.b16 %v632, %v625
    %v651 = vunpack.c.l.b16 %v552
    %v652 = vunpack.c.h.b16 %v552
    %v653 = vunpack.c.l.b16 %v553
    %v654 = vunpack.c.h.b16 %v553
    %v655 = vunpack.c.l.b16 %v554
    %v656 = vunpack.c.h.b16 %v554
    %v657 = vunpack.c.l.b16 %v555
    %v658 = vunpack.c.h.b16 %v555
    %v659 = vunpack.c.l.b16 %v556
    %v660 = vunpack.c.h.b16 %v556
    %v661 = vunpack.c.l.b16 %v557
    %v662 = vunpack.c.h.b16 %v557
    %v663 = vunpack.c.l.b16 %v558
    %v664 = vunpack.c.h.b16 %v558
    %v665 = vunpack.c.l.b16 %v559
    %v666 = vunpack.c.h.b16 %v559
    %v667 = vunpack.c.l.b16 %v560
    %v668 = vunpack.c.h.b16 %v560
    %v669 = vunpack.c.l.b16 %v561
    %v670 = vunpack.c.h.b16 %v561
    %v671 = vunpack.c.l.b16 %v562
    %v672 = vunpack.c.h.b16 %v562
    %v673 = vunpack.c.l.b16 %v563
    %v674 = vunpack.c.h.b16 %v563
    %v675 = vunpack.c.l.b16 %v564
    %v676 = vunpack.c.h.b16 %v564
    %v677 = vunpack.c.l.b16 %v565
    %v678 = vunpack.c.h.b16 %v565
    %v679 = vunpack.c.l.b16 %v566
    %v680 = vunpack.c.h.b16 %v566
    %v681 = vunpack.c.l.b16 %v567
    %v682 = vunpack.c.h.b16 %v567
    %v683 = vpack.c.b16 %v653, %v651
    %v684 = vpack.c.b16 %v654, %v652
    %v685 = vpack.c.b16 %v657, %v655
    %v686 = vpack.c.b16 %v658, %v656
    %v687 = vpack.c.b16 %v661, %v659
    %v688 = vpack.c.b16 %v662, %v660
    %v689 = vpack.c.b16 %v665, %v663
    %v690 = vpack.c.b16 %v666, %v664
    %v691 = vpack.c.b16 %v669, %v667
    %v692 = vpack.c.b16 %v670, %v668
    %v693 = vpack.c.b16 %v673, %v671
    %v694 = vpack.c.b16 %v674, %v672
    %v695 = vpack.c.b16 %v677, %v675
    %v696 = vpack.c.b16 %v678, %v676
    %v697 = vpack.c.b16 %v681, %v679
    %v698 = vpack.c.b16 %v682, %v680
    %715 = vmatprep.subr.bf16.mxu0 %v698
    %716 = vmatpush1.bf16.msra.mxu0 %v697
    %717 = vmatprep.subr.bf16.mxu0 %v696
    %718 = vmatpush1.bf16.msra.mxu0 %v695
    %719 = vmatprep.subr.bf16.mxu0 %v694
    %720 = vmatpush1.bf16.msra.mxu0 %v693
    %721 = vmatprep.subr.bf16.mxu0 %v692
    %722 = vmatpush1.bf16.msra.mxu0 %v691
    %723 = vmatprep.subr.bf16.mxu0 %v690
    %724 = vmatpush1.bf16.msra.mxu0 %v689
    %725 = vmatprep.subr.bf16.mxu0 %v688
    %726 = vmatpush1.bf16.msra.mxu0 %v687
    %727 = vmatprep.subr.bf16.mxu0 %v686
    %728 = vmatpush1.bf16.msra.mxu0 %v685
    %729 = vmatprep.subr.bf16.mxu0 %v684
    %730 = vmatpush1.bf16.msra.mxu0 %v683
    %731 = vmatprep.subr.bf16.mxu0 0
    %732 = vmatpush2.bf16.msra.mxu0 0
    %733 = vmatprep.subr.bf16.mxu0 0
    %734 = vmatpush2.bf16.msra.mxu0 0
    %735 = vmatprep.subr.bf16.mxu0 0
    %736 = vmatpush2.bf16.msra.mxu0 0
    %737 = vmatprep.subr.bf16.mxu0 0
    %738 = vmatpush2.bf16.msra.mxu0 0
    %739 = vmatprep.subr.bf16.mxu0 0
    %740 = vmatpush2.bf16.msra.mxu0 0
    %741 = vmatprep.subr.bf16.mxu0 0
    %742 = vmatpush2.bf16.msra.mxu0 0
    %743 = vmatprep.subr.bf16.mxu0 0
    %744 = vmatpush2.bf16.msra.mxu0 0
    %745 = vmatprep.subr.bf16.mxu0 0
    %746 = vmatpush2.bf16.msra.mxu0 0
    %747 = vmatprep.mubr.bf16.mxu0 0
    %748 = vmatmul.mubr.bf16.gmra.mxu0 %v633
    %v749 = vpop.f32.mrf.mxu0
    %v750 = vadd.f32 %v573, %v749
    %v751 = vpop.f32.mrf.mxu0
    %v752 = vadd.f32 %v577, %v751
    %v753 = vpop.f32.mrf.mxu0
    %v754 = vadd.f32 %v573, %v753
    %v755 = vpop.f32.mrf.mxu0
    %v756 = vadd.f32 %v577, %v755
    %757 = vdwg.mxu0
    %v758 = vmin.f32 %v750, 20.0
    %v759 = vmin.f32 %v752, 20.0
    %v760 = vmin.f32 %v754, 20.0
    %v761 = vmin.f32 %v756, 20.0
    %vm762 = vcmp.gt.f32.partialorder %v750, 20.0
    %vm763 = vcmp.gt.f32.partialorder %v752, 20.0
    %vm764 = vcmp.gt.f32.partialorder %v754, 20.0
    %vm765 = vcmp.gt.f32.partialorder %v756, 20.0
    %v766 = vmul.f32 %v758, 1.442695
    %v767 = vpow.pop %v766
    %v768 = vmul.f32 %v759, 1.442695
    %v769 = vpow.pop %v768
    %v770 = vmul.f32 %v760, 1.442695
    %v771 = vpow.pop %v770
    %v772 = vmul.f32 %v761, 1.442695
    %v773 = vpow.pop %v772
    %v774 = vadd.f32 %v767, 1.0
    %v775 = vlog2.pop %v774
    %v776 = vmul.f32 %v775, 0.6931472
    %v777 = vmul.f32 -0.5, %v767
    %v778 = vadd.f32 %v777, 1.0
    %v779 = vmul.f32 %v778, %v767
    %v780 = vand.u32 2147483647, %v767
    %vm781 = vcmp.lt.f32.partialorder %v780, 0.0004427343
    %v782 = vsel %vm781, %v779, %v776
    %v783 = vadd.f32 %v769, 1.0
    %v784 = vlog2.pop %v783
    %v785 = vmul.f32 %v784, 0.6931472
    %v786 = vmul.f32 -0.5, %v769
    %v787 = vadd.f32 %v786, 1.0
    %v788 = vmul.f32 %v787, %v769
    %v789 = vand.u32 2147483647, %v769
    %vm790 = vcmp.lt.f32.partialorder %v789, 0.0004427343
    %v791 = vsel %vm790, %v788, %v785
    %v792 = vadd.f32 %v771, 1.0
    %v793 = vlog2.pop %v792
    %v794 = vmul.f32 %v793, 0.6931472
    %v795 = vmul.f32 -0.5, %v771
    %v796 = vadd.f32 %v795, 1.0
    %v797 = vmul.f32 %v796, %v771
    %v798 = vand.u32 2147483647, %v771
    %vm799 = vcmp.lt.f32.partialorder %v798, 0.0004427343
    %v800 = vsel %vm799, %v797, %v794
    %v801 = vadd.f32 %v773, 1.0
    %v802 = vlog2.pop %v801
    %v803 = vmul.f32 %v802, 0.6931472
    %v804 = vmul.f32 -0.5, %v773
    %v805 = vadd.f32 %v804, 1.0
    %v806 = vmul.f32 %v805, %v773
    %v807 = vand.u32 2147483647, %v773
    %vm808 = vcmp.lt.f32.partialorder %v807, 0.0004427343
    %v809 = vsel %vm808, %v806, %v803
    %v810 = vsel %vm762, %v750, %v782
    %v811 = vsel %vm763, %v752, %v791
    %v812 = vsel %vm764, %v754, %v800
    %v813 = vsel %vm765, %v756, %v809
    %814 = vst [vmem:[#allocation8] sm:$0xff] %v810
    %815 = vst [vmem:[#allocation8 + $0x8] sm:$0xff] %v811
    %816 = vst [vmem:[#allocation8 + $0x10] sm:$0xff] %v812
    %817 = vst [vmem:[#allocation8 + $0x18] sm:$0xff] %v813
    // Predicated region
    $region34: #{tpu_custom_call.1} parent=1 // pred_check
      _
    $region35: #{tpu_custom_call.1} parent=1 // pred_check_branch
      %819 = sbr.rel (0) target = $region37
    $region36: #{tpu_custom_call.1} parent=1 // pred_region
      %s821 = ssub.s32 512, 512
      %822 = vsyncadd [#allocation4], %s821
      %s823 = sshll.u32 [#allocation8], 4
      %s824 = int_to_ptr.vmem [resolvable:$true] %s823
      %829 = dma.vmem_to_hbm [thread:$0]  %s824, 512, %s5, [#allocation4], 256, 256, 16
    $region37: #{tpu_custom_call.1} parent=1 // pred_fallthru
      _
    // Predicated region
    $region38: #{tpu_custom_call.1} parent=1 // pred_check
      _
    $region39: #{tpu_custom_call.1} parent=1 // pred_check_branch
      %831 = sbr.rel (0) target = $region41
    $region40: #{tpu_custom_call.1} parent=1 // pred_region
      %832 = dma.done [#allocation4], 512
    $region41: #{tpu_custom_call.1} parent=1 // pred_fallthru
      _
    %833 = vsyncpa [#allocation3], 1
    %834 = vsyncpa [#allocation6], 1
    %835 = vsyncpa [#allocation4], 1

// kernel: tpu_custom_call.1
$region0: #{tpu_custom_call.1}
  #allocation0 [shape = 'u32[]', space=smem, size = 0x4, offset = 0x4, fixed_abs, tag = 'smem constant byte address 0x4 - core index']
  #allocation1 [shape = 'u32[144,128]{1,0:T(1,128)}', space=vmem, size = 0x12000, scoped, tag = 'internal scratch']
  %s0 = inlined_call_operand.hbm [shape: f32[16,8,256], index: 0, kind: input, shape index: {}]
  %s1 = inlined_call_operand.hbm [shape: bf16[256,128], index: 1, kind: input, shape index: {}]
  %s2 = inlined_call_operand.vmem [shape: f32[1,128], index: 2, kind: input, shape index: {}]
  %s3 = inlined_call_operand.hbm [shape: bf16[128,256], index: 3, kind: input, shape index: {}]
  %s4 = inlined_call_operand.vmem [shape: f32[1,256], index: 4, kind: input, shape index: {}]
  %s5 = inlined_call_operand.hbm [shape: f32[16,256], index: 5, kind: output, shape index: {}]
  %s6 = sld [smem:[#allocation0]]
  $region42: #{tpu_custom_call.1} parent=0
    _
  %s8 = ssub.s32 1, %s6
  %s9 = scalar_select 0, %s8, %s6
  $region1: #{tpu_custom_call.1} parent=0
    #allocation2 [shape = 'u8[131072]{0}', space=vmem, size = 0x20000, scoped, tag = 'input window, operand 0, single buffered']
    #allocation3 [shape = 's32[1]{0}', space=sflag, size = 0x4, scoped, tag = 'scoped memory for tpu_custom_call.1']
    #allocation4 [shape = 's32[1]{0}', space=sflag, size = 0x4, scoped, tag = 'scoped memory for tpu_custom_call.1']
    #allocation5 [shape = 'u8[65536]{0}', space=vmem, size = 0x10000, scoped, tag = 'input window, operand 1, single buffered']
    #allocation6 [shape = 's32[1]{0}', space=sflag, size = 0x4, scoped, tag = 'scoped memory for tpu_custom_call.1']
    #allocation7 [shape = 'u8[65536]{0}', space=vmem, size = 0x10000, scoped, tag = 'input window, operand 3, single buffered']
    #allocation8 [shape = 'u8[16384]{0}', space=vmem, size = 0x4000, scoped, tag = 'output window, operand 0, single buffered']
    %10 = vsyncpa [#allocation3], 0
    %11 = vsyncpa [#allocation6], 0
    %12 = vsyncpa [#allocation4], 0
    // Predicated region
    $region2: #{tpu_custom_call.1} parent=1 // pred_check
      _
    $region3: #{tpu_custom_call.1} parent=1 // pred_check_branch
      %14 = sbr.rel (0) target = $region5
    $region4: #{tpu_custom_call.1} parent=1 // pred_region
      %s16 = ssub.s32 4096, 4096
      %17 = vsyncadd [#allocation3], %s16
      %s18 = sshll.u32 [#allocation2], 4
      %s19 = int_to_ptr.vmem [resolvable:$true] %s18
      %24 = dma.hbm_to_vmem [thread:$0]  %s0, 4096, %s19, [#allocation3], 256, 256, 16
    $region5: #{tpu_custom_call.1} parent=1 // pred_fallthru
      _
    // Predicated region
    $region6: #{tpu_custom_call.1} parent=1 // pred_check
      _
    $region7: #{tpu_custom_call.1} parent=1 // pred_check_branch
      %26 = sbr.rel (0) target = $region9
    $region8: #{tpu_custom_call.1} parent=1 // pred_region
      %s28 = ssub.s32 2048, 2048
      %29 = vsyncadd [#allocation6], %s28
      %s30 = sshll.u32 [#allocation5], 4
      %s31 = int_to_ptr.vmem [resolvable:$true] %s30
      %36 = dma.hbm_to_vmem [thread:$0]  %s1, 2048, %s31, [#allocation6], 64, 64, 4
    $region9: #{tpu_custom_call.1} parent=1 // pred_fallthru
      _
    // Predicated region
    $region10: #{tpu_custom_call.1} parent=1 // pred_check
      _
    $region11: #{tpu_custom_call.1} parent=1 // pred_check_branch
      %38 = sbr.rel (0) target = $region13
    $region12: #{tpu_custom_call.1} parent=1 // pred_region
      _
    $region13: #{tpu_custom_call.1} parent=1 // pred_fallthru
      _
    // Predicated region
    $region14: #{tpu_custom_call.1} parent=1 // pred_check
      _
    $region15: #{tpu_custom_call.1} parent=1 // pred_check_branch
      %40 = sbr.rel (0) target = $region17
    $region16: #{tpu_custom_call.1} parent=1 // pred_region
      %s42 = ssub.s32 2048, 2048
      %43 = vsyncadd [#allocation6], %s42
      %s44 = sshll.u32 [#allocation7], 4
      %s45 = int_to_ptr.vmem [resolvable:$true] %s44
      %50 = dma.hbm_to_vmem [thread:$0]  %s3, 2048, %s45, [#allocation6], 128, 128, 8
    $region17: #{tpu_custom_call.1} parent=1 // pred_fallthru
      _
    // Predicated region
    $region18: #{tpu_custom_call.1} parent=1 // pred_check
      _
    $region19: #{tpu_custom_call.1} parent=1 // pred_check_branch
      %52 = sbr.rel (0) target = $region21
    $region20: #{tpu_custom_call.1} parent=1 // pred_region
      _
    $region21: #{tpu_custom_call.1} parent=1 // pred_fallthru
      _
    // Predicated region
    $region22: #{tpu_custom_call.1} parent=1 // pred_check
      _
    $region23: #{tpu_custom_call.1} parent=1 // pred_check_branch
      %54 = sbr.rel (0) target = $region25
    $region24: #{tpu_custom_call.1} parent=1 // pred_region
      %55 = dma.done [#allocation3], 4096
    $region25: #{tpu_custom_call.1} parent=1 // pred_fallthru
      _
    // Predicated region
    $region26: #{tpu_custom_call.1} parent=1 // pred_check
      _
    $region27: #{tpu_custom_call.1} parent=1 // pred_check_branch
      %57 = sbr.rel (0) target = $region29
    $region28: #{tpu_custom_call.1} parent=1 // pred_region
      %58 = dma.done [#allocation6], 2048
    $region29: #{tpu_custom_call.1} parent=1 // pred_fallthru
      _
    // Predicated region
    $region30: #{tpu_custom_call.1} parent=1 // pred_check
      _
    $region31: #{tpu_custom_call.1} parent=1 // pred_check_branch
      %60 = sbr.rel (0) target = $region33
    $region32: #{tpu_custom_call.1} parent=1 // pred_region
      %61 = dma.done [#allocation6], 2048
    $region33: #{tpu_custom_call.1} parent=1 // pred_fallthru
      _
    %v63 = vld [vmem:[#allocation2] sm:$0xff]
    %v64 = vld [vmem:[#allocation2 + $0x8] sm:$0xff]
    %v65 = vld [vmem:[#allocation2 + $0x10] sm:$0xff]
    %v66 = vld [vmem:[#allocation2 + $0x18] sm:$0xff]
    %v67 = vld [vmem:[#allocation2 + $0x20] sm:$0xff]
    %v68 = vld [vmem:[#allocation2 + $0x28] sm:$0xff]
    %v69 = vld [vmem:[#allocation2 + $0x30] sm:$0xff]
    %v70 = vld [vmem:[#allocation2 + $0x38] sm:$0xff]
    %v71 = vld [vmem:[#allocation2 + $0x40] sm:$0xff]
    %v72 = vld [vmem:[#allocation2 + $0x48] sm:$0xff]
    %v73 = vld [vmem:[#allocation2 + $0x50] sm:$0xff]
    %v74 = vld [vmem:[#allocation2 + $0x58] sm:$0xff]
    %v75 = vld [vmem:[#allocation2 + $0x60] sm:$0xff]
    %v76 = vld [vmem:[#allocation2 + $0x68] sm:$0xff]
    %v77 = vld [vmem:[#allocation2 + $0x70] sm:$0xff]
    %v78 = vld [vmem:[#allocation2 + $0x78] sm:$0xff]
    %v79 = vld [vmem:[#allocation2 + $0x80] sm:$0xff]
    %v80 = vld [vmem:[#allocation2 + $0x88] sm:$0xff]
    %v81 = vld [vmem:[#allocation2 + $0x90] sm:$0xff]
    %v82 = vld [vmem:[#allocation2 + $0x98] sm:$0xff]
    %v83 = vld [vmem:[#allocation2 + $0xa0] sm:$0xff]
    %v84 = vld [vmem:[#allocation2 + $0xa8] sm:$0xff]
    %v85 = vld [vmem:[#allocation2 + $0xb0] sm:$0xff]
    %v86 = vld [vmem:[#allocation2 + $0xb8] sm:$0xff]
    %v87 = vld [vmem:[#allocation2 + $0xc0] sm:$0xff]
    %v88 = vld [vmem:[#allocation2 + $0xc8] sm:$0xff]
    %v89 = vld [vmem:[#allocation2 + $0xd0] sm:$0xff]
    %v90 = vld [vmem:[#allocation2 + $0xd8] sm:$0xff]
    %v91 = vld [vmem:[#allocation2 + $0xe0] sm:$0xff]
    %v92 = vld [vmem:[#allocation2 + $0xe8] sm:$0xff]
    %v93 = vld [vmem:[#allocation2 + $0xf0] sm:$0xff]
    %v94 = vld [vmem:[#allocation2 + $0xf8] sm:$0xff]
    %v95 = vpack.c.bf16 %v65, %v63
    %v96 = vpack.c.bf16 %v66, %v64
    %v97 = vpack.c.bf16 %v69, %v67
    %v98 = vpack.c.bf16 %v70, %v68
    %v99 = vpack.c.bf16 %v73, %v71
    %v100 = vpack.c.bf16 %v74, %v72
    %v101 = vpack.c.bf16 %v77, %v75
    %v102 = vpack.c.bf16 %v78, %v76
    %v103 = vpack.c.bf16 %v81, %v79
    %v104 = vpack.c.bf16 %v82, %v80
    %v105 = vpack.c.bf16 %v85, %v83
    %v106 = vpack.c.bf16 %v86, %v84
    %v107 = vpack.c.bf16 %v89, %v87
    %v108 = vpack.c.bf16 %v90, %v88
    %v109 = vpack.c.bf16 %v93, %v91
    %v110 = vpack.c.bf16 %v94, %v92
    %v111 = vld [vmem:[#allocation5] sm:$0xf]
    %v112 = vld [vmem:[#allocation5 + $0x4] sm:$0xf]
    %v113 = vld [vmem:[#allocation5 + $0x8] sm:$0xf]
    %v114 = vld [vmem:[#allocation5 + $0xc] sm:$0xf]
    %v115 = vld [vmem:[#allocation5 + $0x10] sm:$0xf]
    %v116 = vld [vmem:[#allocation5 + $0x14] sm:$0xf]
    %v117 = vld [vmem:[#allocation5 + $0x18] sm:$0xf]
    %v118 = vld [vmem:[#allocation5 + $0x1c] sm:$0xf]
    %v119 = vld [vmem:[#allocation5 + $0x20] sm:$0xf]
    %v120 = vld [vmem:[#allocation5 + $0x24] sm:$0xf]
    %v121 = vld [vmem:[#allocation5 + $0x28] sm:$0xf]
    %v122 = vld [vmem:[#allocation5 + $0x2c] sm:$0xf]
    %v123 = vld [vmem:[#allocation5 + $0x30] sm:$0xf]
    %v124 = vld [vmem:[#allocation5 + $0x34] sm:$0xf]
    %v125 = vld [vmem:[#allocation5 + $0x38] sm:$0xf]
    %v126 = vld [vmem:[#allocation5 + $0x3c] sm:$0xf]
    %v127 = vld [vmem:[#allocation5 + $0x40] sm:$0xf]
    %v128 = vld [vmem:[#allocation5 + $0x44] sm:$0xf]
    %v129 = vld [vmem:[#allocation5 + $0x48] sm:$0xf]
    %v130 = vld [vmem:[#allocation5 + $0x4c] sm:$0xf]
    %v131 = vld [vmem:[#allocation5 + $0x50] sm:$0xf]
    %v132 = vld [vmem:[#allocation5 + $0x54] sm:$0xf]
    %v133 = vld [vmem:[#allocation5 + $0x58] sm:$0xf]
    %v134 = vld [vmem:[#allocation5 + $0x5c] sm:$0xf]
    %v135 = vld [vmem:[#allocation5 + $0x60] sm:$0xf]
    %v136 = vld [vmem:[#allocation5 + $0x64] sm:$0xf]
    %v137 = vld [vmem:[#allocation5 + $0x68] sm:$0xf]
    %v138 = vld [vmem:[#allocation5 + $0x6c] sm:$0xf]
    %v139 = vld [vmem:[#allocation5 + $0x70] sm:$0xf]
    %v140 = vld [vmem:[#allocation5 + $0x74] sm:$0xf]
    %v141 = vld [vmem:[#allocation5 + $0x78] sm:$0xf]
    %v142 = vld [vmem:[#allocation5 + $0x7c] sm:$0xf]
    %v143 = vld [vmem:[%s2] sm:$0x1]
    %v145 = vlaneseq
    %v146 = vshrl.u32 %v145, 7
    %v147 = vsub.s32 0, %v146
    %v148 = vrot.slane %v143, %v147
    %v182 = vunpack.c.l.b16 %v111
    %v183 = vunpack.c.l.b16 %v112
    %v184 = vunpack.c.l.b16 %v113
    %v185 = vunpack.c.l.b16 %v114
    %v186 = vunpack.c.l.b16 %v115
    %v187 = vunpack.c.l.b16 %v116
    %v188 = vunpack.c.l.b16 %v117
    %v189 = vunpack.c.l.b16 %v118
    %v190 = vunpack.c.l.b16 %v119
    %v191 = vunpack.c.l.b16 %v120
    %v192 = vunpack.c.l.b16 %v121
    %v193 = vunpack.c.l.b16 %v122
    %v194 = vunpack.c.l.b16 %v123
    %v195 = vunpack.c.l.b16 %v124
    %v196 = vunpack.c.l.b16 %v125
    %v197 = vunpack.c.l.b16 %v126
    %v198 = vunpack.c.l.b16 %v127
    %v199 = vunpack.c.l.b16 %v128
    %v200 = vunpack.c.l.b16 %v129
    %v201 = vunpack.c.l.b16 %v130
    %v202 = vunpack.c.l.b16 %v131
    %v203 = vunpack.c.l.b16 %v132
    %v204 = vunpack.c.l.b16 %v133
    %v205 = vunpack.c.l.b16 %v134
    %v206 = vunpack.c.l.b16 %v135
    %v207 = vunpack.c.l.b16 %v136
    %v208 = vunpack.c.l.b16 %v137
    %v209 = vunpack.c.l.b16 %v138
    %v210 = vunpack.c.l.b16 %v139
    %v211 = vunpack.c.l.b16 %v140
    %v212 = vunpack.c.l.b16 %v141
    %v213 = vunpack.c.l.b16 %v142
    %v214 = vpack.c.b16 %v183, %v182
    %v215 = vpack.c.b16 %v185, %v184
    %v216 = vpack.c.b16 %v187, %v186
    %v217 = vpack.c.b16 %v189, %v188
    %v218 = vpack.c.b16 %v191, %v190
    %v219 = vpack.c.b16 %v193, %v192
    %v220 = vpack.c.b16 %v195, %v194
    %v221 = vpack.c.b16 %v197, %v196
    %v222 = vpack.c.b16 %v199, %v198
    %v223 = vpack.c.b16 %v201, %v200
    %v224 = vpack.c.b16 %v203, %v202
    %v225 = vpack.c.b16 %v205, %v204
    %v226 = vpack.c.b16 %v207, %v206
    %v227 = vpack.c.b16 %v209, %v208
    %v228 = vpack.c.b16 %v211, %v210
    %v229 = vpack.c.b16 %v213, %v212
    %246 = vmatprep.subr.bf16.mxu0 0
    %247 = vmatpush1.bf16.msra.mxu0 %v221
    %248 = vmatprep.subr.bf16.mxu0 0
    %249 = vmatpush1.bf16.msra.mxu0 %v220
    %250 = vmatprep.subr.bf16.mxu0 0
    %251 = vmatpush1.bf16.msra.mxu0 %v219
    %252 = vmatprep.subr.bf16.mxu0 0
    %253 = vmatpush1.bf16.msra.mxu0 %v218
    %254 = vmatprep.subr.bf16.mxu0 0
    %255 = vmatpush1.bf16.msra.mxu0 %v217
    %256 = vmatprep.subr.bf16.mxu0 0
    %257 = vmatpush1.bf16.msra.mxu0 %v216
    %258 = vmatprep.subr.bf16.mxu0 0
    %259 = vmatpush1.bf16.msra.mxu0 %v215
    %260 = vmatprep.subr.bf16.mxu0 0
    %261 = vmatpush1.bf16.msra.mxu0 %v214
    %262 = vmatprep.subr.bf16.mxu0 0
    %263 = vmatpush2.bf16.msra.mxu0 %v229
    %264 = vmatprep.subr.bf16.mxu0 0
    %265 = vmatpush2.bf16.msra.mxu0 %v228
    %266 = vmatprep.subr.bf16.mxu0 0
    %267 = vmatpush2.bf16.msra.mxu0 %v227
    %268 = vmatprep.subr.bf16.mxu0 0
    %269 = vmatpush2.bf16.msra.mxu0 %v226
    %270 = vmatprep.subr.bf16.mxu0 0
    %271 = vmatpush2.bf16.msra.mxu0 %v225
    %272 = vmatprep.subr.bf16.mxu0 0
    %273 = vmatpush2.bf16.msra.mxu0 %v224
    %274 = vmatprep.subr.bf16.mxu0 0
    %275 = vmatpush2.bf16.msra.mxu0 %v223
    %276 = vmatprep.subr.bf16.mxu0 0
    %277 = vmatpush2.bf16.msra.mxu0 %v222
    %278 = vmatprep.mubr.bf16.mxu0 %v96
    %279 = vmatmul.mubr.bf16.gmra.mxu0 %v95
    %v280 = vpop.f32.mrf.mxu0
    %v281 = vadd.f32 %v148, %v280
    %v282 = vpop.f32.mrf.mxu0
    %v283 = vpop.f32.mrf.mxu0
    %v284 = vadd.f32 %v148, %v283
    %v285 = vpop.f32.mrf.mxu0
    %286 = vmatprep.mubr.bf16.mxu0 %v98
    %287 = vmatmul.mubr.bf16.gmra.mxu0 %v97
    %v288 = vpop.f32.mrf.mxu0
    %v289 = vadd.f32 %v148, %v288
    %v290 = vpop.f32.mrf.mxu0
    %v291 = vpop.f32.mrf.mxu0
    %v292 = vadd.f32 %v148, %v291
    %v293 = vpop.f32.mrf.mxu0
    %294 = vmatprep.mubr.bf16.mxu0 %v100
    %295 = vmatmul.mubr.bf16.gmra.mxu0 %v99
    %v296 = vpop.f32.mrf.mxu0
    %v297 = vadd.f32 %v148, %v296
    %v298 = vpop.f32.mrf.mxu0
    %v299 = vpop.f32.mrf.mxu0
    %v300 = vadd.f32 %v148, %v299
    %v301 = vpop.f32.mrf.mxu0
    %302 = vmatprep.mubr.bf16.mxu0 %v102
    %303 = vmatmul.mubr.bf16.gmra.mxu0 %v101
    %v304 = vpop.f32.mrf.mxu0
    %v305 = vadd.f32 %v148, %v304
    %v306 = vpop.f32.mrf.mxu0
    %v307 = vpop.f32.mrf.mxu0
    %v308 = vadd.f32 %v148, %v307
    %v309 = vpop.f32.mrf.mxu0
    %310 = vmatprep.mubr.bf16.mxu0 %v104
    %311 = vmatmul.mubr.bf16.gmra.mxu0 %v103
    %v312 = vpop.f32.mrf.mxu0
    %v313 = vadd.f32 %v148, %v312
    %v314 = vpop.f32.mrf.mxu0
    %v315 = vpop.f32.mrf.mxu0
    %v316 = vadd.f32 %v148, %v315
    %v317 = vpop.f32.mrf.mxu0
    %318 = vmatprep.mubr.bf16.mxu0 %v106
    %319 = vmatmul.mubr.bf16.gmra.mxu0 %v105
    %v320 = vpop.f32.mrf.mxu0
    %v321 = vadd.f32 %v148, %v320
    %v322 = vpop.f32.mrf.mxu0
    %v323 = vpop.f32.mrf.mxu0
    %v324 = vadd.f32 %v148, %v323
    %v325 = vpop.f32.mrf.mxu0
    %326 = vmatprep.mubr.bf16.mxu0 %v108
    %327 = vmatmul.mubr.bf16.gmra.mxu0 %v107
    %v328 = vpop.f32.mrf.mxu0
    %v329 = vadd.f32 %v148, %v328
    %v330 = vpop.f32.mrf.mxu0
    %v331 = vpop.f32.mrf.mxu0
    %v332 = vadd.f32 %v148, %v331
    %v333 = vpop.f32.mrf.mxu0
    %334 = vmatprep.mubr.bf16.mxu0 %v110
    %335 = vmatmul.mubr.bf16.gmra.mxu0 %v109
    %v336 = vpop.f32.mrf.mxu0
    %v337 = vadd.f32 %v148, %v336
    %v338 = vpop.f32.mrf.mxu0
    %v339 = vpop.f32.mrf.mxu0
    %v340 = vadd.f32 %v148, %v339
    %v341 = vpop.f32.mrf.mxu0
    %342 = vdwg.mxu0
    %v343 = vmul.f32 %v281, 0.5
    %v344 = vmul.f32 %v284, 0.5
    %v345 = vmul.f32 %v289, 0.5
    %v346 = vmul.f32 %v292, 0.5
    %v347 = vmul.f32 %v297, 0.5
    %v348 = vmul.f32 %v300, 0.5
    %v349 = vmul.f32 %v305, 0.5
    %v350 = vmul.f32 %v308, 0.5
    %v351 = vmul.f32 %v313, 0.5
    %v352 = vmul.f32 %v316, 0.5
    %v353 = vmul.f32 %v321, 0.5
    %v354 = vmul.f32 %v324, 0.5
    %v355 = vmul.f32 %v329, 0.5
    %v356 = vmul.f32 %v332, 0.5
    %v357 = vmul.f32 %v337, 0.5
    %v358 = vmul.f32 %v340, 0.5
    %v359 = vmul.f32 %v281, 0.70710677
    %v360 = vmul.f32 %v284, 0.70710677
    %v361 = vmul.f32 %v289, 0.70710677
    %v362 = vmul.f32 %v292, 0.70710677
    %v363 = vmul.f32 %v297, 0.70710677
    %v364 = vmul.f32 %v300, 0.70710677
    %v365 = vmul.f32 %v305, 0.70710677
    %v366 = vmul.f32 %v308, 0.70710677
    %v367 = vmul.f32 %v313, 0.70710677
    %v368 = vmul.f32 %v316, 0.70710677
    %v369 = vmul.f32 %v321, 0.70710677
    %v370 = vmul.f32 %v324, 0.70710677
    %v371 = vmul.f32 %v329, 0.70710677
    %v372 = vmul.f32 %v332, 0.70710677
    %v373 = vmul.f32 %v337, 0.70710677
    %v374 = vmul.f32 %v340, 0.70710677
    %v375 = verf.f32.pop %v359
    %v376 = verf.f32.pop %v360
    %v377 = verf.f32.pop %v361
    %v378 = verf.f32.pop %v362
    %v379 = verf.f32.pop %v363
    %v380 = verf.f32.pop %v364
    %v381 = verf.f32.pop %v365
    %v382 = verf.f32.pop %v366
    %v383 = verf.f32.pop %v367
    %v384 = verf.f32.pop %v368
    %v385 = verf.f32.pop %v369
    %v386 = verf.f32.pop %v370
    %v387 = verf.f32.pop %v371
    %v388 = verf.f32.pop %v372
    %v389 = verf.f32.pop %v373
    %v390 = verf.f32.pop %v374
    %v391 = vadd.f32 %v375, 1.0
    %v392 = vadd.f32 %v376, 1.0
    %v393 = vadd.f32 %v377, 1.0
    %v394 = vadd.f32 %v378, 1.0
    %v395 = vadd.f32 %v379, 1.0
    %v396 = vadd.f32 %v380, 1.0
    %v397 = vadd.f32 %v381, 1.0
    %v398 = vadd.f32 %v382, 1.0
    %v399 = vadd.f32 %v383, 1.0
    %v400 = vadd.f32 %v384, 1.0
    %v401 = vadd.f32 %v385, 1.0
    %v402 = vadd.f32 %v386, 1.0
    %v403 = vadd.f32 %v387, 1.0
    %v404 = vadd.f32 %v388, 1.0
    %v405 = vadd.f32 %v389, 1.0
    %v406 = vadd.f32 %v390, 1.0
    %v407 = vmul.f32 %v343, %v391
    %v408 = vmul.f32 %v344, %v392
    %v409 = vmul.f32 %v345, %v393
    %v410 = vmul.f32 %v346, %v394
    %v411 = vmul.f32 %v347, %v395
    %v412 = vmul.f32 %v348, %v396
    %v413 = vmul.f32 %v349, %v397
    %v414 = vmul.f32 %v350, %v398
    %v415 = vmul.f32 %v351, %v399
    %v416 = vmul.f32 %v352, %v400
    %v417 = vmul.f32 %v353, %v401
    %v418 = vmul.f32 %v354, %v402
    %v419 = vmul.f32 %v355, %v403
    %v420 = vmul.f32 %v356, %v404
    %v421 = vmul.f32 %v357, %v405
    %v422 = vmul.f32 %v358, %v406
    %v423 = vrot.slane %v407, 4
    %v424 = vadd.f32 %v407, %v423
    %v425 = vrot.slane %v424, 2
    %v426 = vadd.f32 %v424, %v425
    %v427 = vrot.slane %v426, 1
    %v428 = vadd.f32 %v426, %v427
    %v429 = vrot.slane %v408, 4
    %v430 = vadd.f32 %v408, %v429
    %v431 = vrot.slane %v430, 2
    %v432 = vadd.f32 %v430, %v431
    %v433 = vrot.slane %v432, 1
    %v434 = vadd.f32 %v432, %v433
    %v435 = vrot.slane %v409, 4
    %v436 = vadd.f32 %v409, %v435
    %v437 = vrot.slane %v436, 2
    %v438 = vadd.f32 %v436, %v437
    %v439 = vrot.slane %v438, 1
    %v440 = vadd.f32 %v438, %v439
    %v441 = vrot.slane %v410, 4
    %v442 = vadd.f32 %v410, %v441
    %v443 = vrot.slane %v442, 2
    %v444 = vadd.f32 %v442, %v443
    %v445 = vrot.slane %v444, 1
    %v446 = vadd.f32 %v444, %v445
    %v447 = vrot.slane %v411, 4
    %v448 = vadd.f32 %v411, %v447
    %v449 = vrot.slane %v448, 2
    %v450 = vadd.f32 %v448, %v449
    %v451 = vrot.slane %v450, 1
    %v452 = vadd.f32 %v450, %v451
    %v453 = vrot.slane %v412, 4
    %v454 = vadd.f32 %v412, %v453
    %v455 = vrot.slane %v454, 2
    %v456 = vadd.f32 %v454, %v455
    %v457 = vrot.slane %v456, 1
    %v458 = vadd.f32 %v456, %v457
    %v459 = vrot.slane %v413, 4
    %v460 = vadd.f32 %v413, %v459
    %v461 = vrot.slane %v460, 2
    %v462 = vadd.f32 %v460, %v461
    %v463 = vrot.slane %v462, 1
    %v464 = vadd.f32 %v462, %v463
    %v465 = vrot.slane %v414, 4
    %v466 = vadd.f32 %v414, %v465
    %v467 = vrot.slane %v466, 2
    %v468 = vadd.f32 %v466, %v467
    %v469 = vrot.slane %v468, 1
    %v470 = vadd.f32 %v468, %v469
    %v471 = vrot.slane %v415, 4
    %v472 = vadd.f32 %v415, %v471
    %v473 = vrot.slane %v472, 2
    %v474 = vadd.f32 %v472, %v473
    %v475 = vrot.slane %v474, 1
    %v476 = vadd.f32 %v474, %v475
    %v477 = vrot.slane %v416, 4
    %v478 = vadd.f32 %v416, %v477
    %v479 = vrot.slane %v478, 2
    %v480 = vadd.f32 %v478, %v479
    %v481 = vrot.slane %v480, 1
    %v482 = vadd.f32 %v480, %v481
    %v483 = vrot.slane %v417, 4
    %v484 = vadd.f32 %v417, %v483
    %v485 = vrot.slane %v484, 2
    %v486 = vadd.f32 %v484, %v485
    %v487 = vrot.slane %v486, 1
    %v488 = vadd.f32 %v486, %v487
    %v489 = vrot.slane %v418, 4
    %v490 = vadd.f32 %v418, %v489
    %v491 = vrot.slane %v490, 2
    %v492 = vadd.f32 %v490, %v491
    %v493 = vrot.slane %v492, 1
    %v494 = vadd.f32 %v492, %v493
    %v495 = vrot.slane %v419, 4
    %v496 = vadd.f32 %v419, %v495
    %v497 = vrot.slane %v496, 2
    %v498 = vadd.f32 %v496, %v497
    %v499 = vrot.slane %v498, 1
    %v500 = vadd.f32 %v498, %v499
    %v501 = vrot.slane %v420, 4
    %v502 = vadd.f32 %v420, %v501
    %v503 = vrot.slane %v502, 2
    %v504 = vadd.f32 %v502, %v503
    %v505 = vrot.slane %v504, 1
    %v506 = vadd.f32 %v504, %v505
    %v507 = vrot.slane %v421, 4
    %v508 = vadd.f32 %v421, %v507
    %v509 = vrot.slane %v508, 2
    %v510 = vadd.f32 %v508, %v509
    %v511 = vrot.slane %v510, 1
    %v512 = vadd.f32 %v510, %v511
    %v513 = vrot.slane %v422, 4
    %v514 = vadd.f32 %v422, %v513
    %v515 = vrot.slane %v514, 2
    %v516 = vadd.f32 %v514, %v515
    %v517 = vrot.slane %v516, 1
    %v518 = vadd.f32 %v516, %v517
    %v519 = vrcp.pop 8.0
    %v520 = vmul.f32 %v428, %v519
    %v521 = vmul.f32 %v434, %v519
    %v522 = vmul.f32 %v440, %v519
    %v523 = vmul.f32 %v446, %v519
    %v524 = vmul.f32 %v452, %v519
    %v525 = vmul.f32 %v458, %v519
    %v526 = vmul.f32 %v464, %v519
    %v527 = vmul.f32 %v470, %v519
    %v528 = vmul.f32 %v476, %v519
    %v529 = vmul.f32 %v482, %v519
    %v530 = vmul.f32 %v488, %v519
    %v531 = vmul.f32 %v494, %v519
    %v532 = vmul.f32 %v500, %v519
    %v533 = vmul.f32 %v506, %v519
    %v534 = vmul.f32 %v512, %v519
    %v535 = vmul.f32 %v518, %v519
    %v536 = vpack.c.bf16 %v520, %v520
    %v537 = vpack.c.bf16 %v521, %v521
    %v538 = vpack.c.bf16 %v522, %v522
    %v539 = vpack.c.bf16 %v523, %v523
    %v540 = vpack.c.bf16 %v524, %v524
    %v541 = vpack.c.bf16 %v525, %v525
    %v542 = vpack.c.bf16 %v526, %v526
    %v543 = vpack.c.bf16 %v527, %v527
    %v544 = vpack.c.bf16 %v528, %v528
    %v545 = vpack.c.bf16 %v529, %v529
    %v546 = vpack.c.bf16 %v530, %v530
    %v547 = vpack.c.bf16 %v531, %v531
    %v548 = vpack.c.bf16 %v532, %v532
    %v549 = vpack.c.bf16 %v533, %v533
    %v550 = vpack.c.bf16 %v534, %v534
    %v551 = vpack.c.bf16 %v535, %v535
    %v552 = vld [vmem:[#allocation7] sm:$0xff]
    %v553 = vld [vmem:[#allocation7 + $0x8] sm:$0xff]
    %v554 = vld [vmem:[#allocation7 + $0x10] sm:$0xff]
    %v555 = vld [vmem:[#allocation7 + $0x18] sm:$0xff]
    %v556 = vld [vmem:[#allocation7 + $0x20] sm:$0xff]
    %v557 = vld [vmem:[#allocation7 + $0x28] sm:$0xff]
    %v558 = vld [vmem:[#allocation7 + $0x30] sm:$0xff]
    %v559 = vld [vmem:[#allocation7 + $0x38] sm:$0xff]
    %v560 = vld [vmem:[#allocation7 + $0x40] sm:$0xff]
    %v561 = vld [vmem:[#allocation7 + $0x48] sm:$0xff]
    %v562 = vld [vmem:[#allocation7 + $0x50] sm:$0xff]
    %v563 = vld [vmem:[#allocation7 + $0x58] sm:$0xff]
    %v564 = vld [vmem:[#allocation7 + $0x60] sm:$0xff]
    %v565 = vld [vmem:[#allocation7 + $0x68] sm:$0xff]
    %v566 = vld [vmem:[#allocation7 + $0x70] sm:$0xff]
    %v567 = vld [vmem:[#allocation7 + $0x78] sm:$0xff]
    %v568 = vld [vmem:[%s4] sm:$0x3]
    %v570 = vlaneseq
    %v571 = vshrl.u32 %v570, 7
    %v572 = vsub.s32 0, %v571
    %v573 = vrot.slane %v568, %v572
    %v574 = vlaneseq
    %v575 = vshrl.u32 %v574, 7
    %v576 = vsub.s32 1, %v575
    %v577 = vrot.slane %v568, %v576
    %v596 = vunpack.c.l.b16 %v536
    %v597 = vunpack.c.l.b16 %v537
    %v598 = vunpack.c.l.b16 %v538
    %v599 = vunpack.c.l.b16 %v539
    %v600 = vunpack.c.l.b16 %v540
    %v601 = vunpack.c.l.b16 %v541
    %v602 = vunpack.c.l.b16 %v542
    %v603 = vunpack.c.l.b16 %v543
    %v604 = vunpack.c.l.b16 %v544
    %v605 = vunpack.c.l.b16 %v545
    %v606 = vunpack.c.l.b16 %v546
    %v607 = vunpack.c.l.b16 %v547
    %v608 = vunpack.c.l.b16 %v548
    %v609 = vunpack.c.l.b16 %v549
    %v610 = vunpack.c.l.b16 %v550
    %v611 = vunpack.c.l.b16 %v551
    %vm612 = vcmask 1041409
    %v613 = vsel %vm612, %v597, %v596
    %vm614 = vcmask 1042434
    %v615 = vsel %vm614, %v598, %v613
    %vm616 = vcmask 1043459
    %v617 = vsel %vm616, %v599, %v615
    %vm618 = vcmask 1044484
    %v619 = vsel %vm618, %v600, %v617
    %vm620 = vcmask 1045509
    %v621 = vsel %vm620, %v601, %v619
    %vm622 = vcmask 1046534
    %v623 = vsel %vm622, %v602, %v621
    %vm624 = vcmask 1047559
    %v625 = vsel %vm624, %v603, %v623
    %v626 = vsel %vm612, %v605, %v604
    %v627 = vsel %vm614, %v606, %v626
    %v628 = vsel %vm616, %v607, %v627
    %v629 = vsel %vm618, %v608, %v628
    %v630 = vsel %vm620, %v609, %v629
    %v631 = vsel %vm622, %v610, %v630
    %v632 = vsel %vm624, %v611, %v631
    %v633 = vpack.c.b16 %v632, %v625
    %v651 = vunpack.c.l.b16 %v552
    %v652 = vunpack.c.h.b16 %v552
    %v653 = vunpack.c.l.b16 %v553
    %v654 = vunpack.c.h.b16 %v553
    %v655 = vunpack.c.l.b16 %v554
    %v656 = vunpack.c.h.b16 %v554
    %v657 = vunpack.c.l.b16 %v555
    %v658 = vunpack.c.h.b16 %v555
    %v659 = vunpack.c.l.b16 %v556
    %v660 = vunpack.c.h.b16 %v556
    %v661 = vunpack.c.l.b16 %v557
    %v662 = vunpack.c.h.b16 %v557
    %v663 = vunpack.c.l.b16 %v558
    %v664 = vunpack.c.h.b16 %v558
    %v665 = vunpack.c.l.b16 %v559
    %v666 = vunpack.c.h.b16 %v559
    %v667 = vunpack.c.l.b16 %v560
    %v668 = vunpack.c.h.b16 %v560
    %v669 = vunpack.c.l.b16 %v561
    %v670 = vunpack.c.h.b16 %v561
    %v671 = vunpack.c.l.b16 %v562
    %v672 = vunpack.c.h.b16 %v562
    %v673 = vunpack.c.l.b16 %v563
    %v674 = vunpack.c.h.b16 %v563
    %v675 = vunpack.c.l.b16 %v564
    %v676 = vunpack.c.h.b16 %v564
    %v677 = vunpack.c.l.b16 %v565
    %v678 = vunpack.c.h.b16 %v565
    %v679 = vunpack.c.l.b16 %v566
    %v680 = vunpack.c.h.b16 %v566
    %v681 = vunpack.c.l.b16 %v567
    %v682 = vunpack.c.h.b16 %v567
    %v683 = vpack.c.b16 %v653, %v651
    %v684 = vpack.c.b16 %v654, %v652
    %v685 = vpack.c.b16 %v657, %v655
    %v686 = vpack.c.b16 %v658, %v656
    %v687 = vpack.c.b16 %v661, %v659
    %v688 = vpack.c.b16 %v662, %v660
    %v689 = vpack.c.b16 %v665, %v663
    %v690 = vpack.c.b16 %v666, %v664
    %v691 = vpack.c.b16 %v669, %v667
    %v692 = vpack.c.b16 %v670, %v668
    %v693 = vpack.c.b16 %v673, %v671
    %v694 = vpack.c.b16 %v674, %v672
    %v695 = vpack.c.b16 %v677, %v675
    %v696 = vpack.c.b16 %v678, %v676
    %v697 = vpack.c.b16 %v681, %v679
    %v698 = vpack.c.b16 %v682, %v680
    %715 = vmatprep.subr.bf16.mxu0 %v698
    %716 = vmatpush1.bf16.msra.mxu0 %v697
    %717 = vmatprep.subr.bf16.mxu0 %v696
    %718 = vmatpush1.bf16.msra.mxu0 %v695
    %719 = vmatprep.subr.bf16.mxu0 %v694
    %720 = vmatpush1.bf16.msra.mxu0 %v693
    %721 = vmatprep.subr.bf16.mxu0 %v692
    %722 = vmatpush1.bf16.msra.mxu0 %v691
    %723 = vmatprep.subr.bf16.mxu0 %v690
    %724 = vmatpush1.bf16.msra.mxu0 %v689
    %725 = vmatprep.subr.bf16.mxu0 %v688
    %726 = vmatpush1.bf16.msra.mxu0 %v687
    %727 = vmatprep.subr.bf16.mxu0 %v686
    %728 = vmatpush1.bf16.msra.mxu0 %v685
    %729 = vmatprep.subr.bf16.mxu0 %v684
    %730 = vmatpush1.bf16.msra.mxu0 %v683
    %731 = vmatprep.subr.bf16.mxu0 0
    %732 = vmatpush2.bf16.msra.mxu0 0
    %733 = vmatprep.subr.bf16.mxu0 0
    %734 = vmatpush2.bf16.msra.mxu0 0
    %735 = vmatprep.subr.bf16.mxu0 0
    %736 = vmatpush2.bf16.msra.mxu0 0
    %737 = vmatprep.subr.bf16.mxu0 0
    %738 = vmatpush2.bf16.msra.mxu0 0
    %739 = vmatprep.subr.bf16.mxu0 0
    %740 = vmatpush2.bf16.msra.mxu0 0
    %741 = vmatprep.subr.bf16.mxu0 0
    %742 = vmatpush2.bf16.msra.mxu0 0
    %743 = vmatprep.subr.bf16.mxu0 0
    %744 = vmatpush2.bf16.msra.mxu0 0
    %745 = vmatprep.subr.bf16.mxu0 0
    %746 = vmatpush2.bf16.msra.mxu0 0
    %747 = vmatprep.mubr.bf16.mxu0 0
    %748 = vmatmul.mubr.bf16.gmra.mxu0 %v633
    %v749 = vpop.f32.mrf.mxu0
    %v750 = vadd.f32 %v573, %v749
    %v751 = vpop.f32.mrf.mxu0
    %v752 = vadd.f32 %v577, %v751
    %v753 = vpop.f32.mrf.mxu0
    %v754 = vadd.f32 %v573, %v753
    %v755 = vpop.f32.mrf.mxu0
    %v756 = vadd.f32 %v577, %v755
    %757 = vdwg.mxu0
    %v758 = vmin.f32 %v750, 20.0
    %v759 = vmin.f32 %v752, 20.0
    %v760 = vmin.f32 %v754, 20.0
    %v761 = vmin.f32 %v756, 20.0
    %vm762 = vcmp.gt.f32.partialorder %v750, 20.0
    %vm763 = vcmp.gt.f32.partialorder %v752, 20.0
    %vm764 = vcmp.gt.f32.partialorder %v754, 20.0
    %vm765 = vcmp.gt.f32.partialorder %v756, 20.0
    %v766 = vmul.f32 %v758, 1.442695
    %v767 = vpow.pop %v766
    %v768 = vmul.f32 %v759, 1.442695
    %v769 = vpow.pop %v768
    %v770 = vmul.f32 %v760, 1.442695
    %v771 = vpow.pop %v770
    %v772 = vmul.f32 %v761, 1.442695
    %v773 = vpow.pop %v772
    %v774 = vadd.f32 %v767, 1.0
    %v775 = vlog2.pop %v774
    %v776 = vmul.f32 %v775, 0.6931472
    %v777 = vmul.f32 -0.5, %v767
    %v778 = vadd.f32 %v777, 1.0
    %v779 = vmul.f32 %v778, %v767
    %v780 = vand.u32 2147483647, %v767
    %vm781 = vcmp.lt.f32.partialorder %v780, 0.0004427343
    %v782 = vsel %vm781, %v779, %v776
    %v783 = vadd.f32 %v769, 1.0
    %v784 = vlog2.pop %v783
    %v785 = vmul.f32 %v784, 0.6931472
    %v786 = vmul.f32 -0.5, %v769
    %v787 = vadd.f32 %v786, 1.0
    %v788 = vmul.f32 %v787, %v769
    %v789 = vand.u32 2147483647, %v769
    %vm790 = vcmp.lt.f32.partialorder %v789, 0.0004427343
    %v791 = vsel %vm790, %v788, %v785
    %v792 = vadd.f32 %v771, 1.0
    %v793 = vlog2.pop %v792
    %v794 = vmul.f32 %v793, 0.6931472
    %v795 = vmul.f32 -0.5, %v771
    %v796 = vadd.f32 %v795, 1.0
    %v797 = vmul.f32 %v796, %v771
    %v798 = vand.u32 2147483647, %v771
    %vm799 = vcmp.lt.f32.partialorder %v798, 0.0004427343
    %v800 = vsel %vm799, %v797, %v794
    %v801 = vadd.f32 %v773, 1.0
    %v802 = vlog2.pop %v801
    %v803 = vmul.f32 %v802, 0.6931472
    %v804 = vmul.f32 -0.5, %v773
    %v805 = vadd.f32 %v804, 1.0
    %v806 = vmul.f32 %v805, %v773
    %v807 = vand.u32 2147483647, %v773
    %vm808 = vcmp.lt.f32.partialorder %v807, 0.0004427343
    %v809 = vsel %vm808, %v806, %v803
    %v810 = vsel %vm762, %v750, %v782
    %v811 = vsel %vm763, %v752, %v791
    %v812 = vsel %vm764, %v754, %v800
    %v813 = vsel %vm765, %v756, %v809
    %814 = vst [vmem:[#allocation8] sm:$0xff] %v810
    %815 = vst [vmem:[#allocation8 + $0x8] sm:$0xff] %v811
    %816 = vst [vmem:[#allocation8 + $0x10] sm:$0xff] %v812
    %817 = vst [vmem:[#allocation8 + $0x18] sm:$0xff] %v813
    // Predicated region
    $region34: #{tpu_custom_call.1} parent=1 // pred_check
      _
    $region35: #{tpu_custom_call.1} parent=1 // pred_check_branch
      %819 = sbr.rel (0) target = $region37
    $region36: #{tpu_custom_call.1} parent=1 // pred_region
      %s821 = ssub.s32 512, 512
      %822 = vsyncadd [#allocation4], %s821
      %s823 = sshll.u32 [#allocation8], 4
      %s824 = int_to_ptr.vmem [resolvable:$true] %s823
      %829 = dma.vmem_to_hbm [thread:$0]  %s824, 512, %s5, [#allocation4], 256, 256, 16
    $region37: #{tpu_custom_call.1} parent=1 // pred_fallthru
      _
    // Predicated region
    $region38: #{tpu_custom_call.1} parent=1 // pred_check
      _
    $region39: #{tpu_custom_call.1} parent=1 // pred_check_branch
      %831 = sbr.rel (0) target = $region41
    $region40: #{tpu_custom_call.1} parent=1 // pred_region
      %832 = dma.done [#allocation4], 512
    $region41: #{tpu_custom_call.1} parent=1 // pred_fallthru
      _
    %833 = vsyncpa [#allocation3], 1
    %834 = vsyncpa [#allocation6], 1
    %835 = vsyncpa [#allocation4], 1

</llo_original>
